<compile_context>
chip_gen: v7x
topology: tpu7x:2x2x1
jax: 0.10.0
libtpu: 0.0.40
codegen_flags: <defaults>
</compile_context>

<pallas_src>
import jax
import jax.numpy as jnp
from jax.experimental import pallas as pl
from jax.experimental.pallas import tpu as pltpu


_VMEM_LIMIT = 48 * 1024 * 1024   # safe on v5e/v6e (128 MiB) and v7x (64 MiB)


def _cdiv(a, b):
    return -(-a // b)


def _round_up(x, m):
    return _cdiv(x, m) * m


def _pick_r_block(R, P, target_rows=1024, min_rows=256):
    """Largest divisor of R whose tile has <= target_rows matmul rows; prefer >=2
    grid steps (v7x megacore) as long as tiles keep >= min_rows rows."""
    divs = [d for d in range(1, R + 1) if R % d == 0]
    best = max([d for d in divs if d * P * P <= target_rows], default=1)
    if R // best < 2:
        smaller = [d for d in divs if d < best and d * P * P >= min_rows]
        if smaller:
            best = max(smaller)
    return best


# ----------------------------- Pallas kernels -------------------------------

def _conv3x3_relu_kernel(x_ref, w_ref, b_ref, o_ref):
    # x_ref: (RB, P+2, P+2, Cin) bf16 zero-padded ROI tile
    # w_ref: (9*Cin, Cout) bf16 (rows ordered (dy, dx, cin))
    # b_ref: (1, Cout) f32, o_ref: (RB, P, P, Cout) bf16
    RB, _, _, Cin = x_ref.shape
    P = o_ref.shape[1]
    Cout = o_ref.shape[-1]
    # Layout-munging (window slices / reshapes / minor-dim concat) runs on the
    # 32-bit path; the matmul itself runs on bf16 operands with an f32 accumulator.
    xv = x_ref[...].astype(jnp.float32)
    cols = [xv[:, dy:dy + P, dx:dx + P, :].reshape(RB * P * P, Cin)
            for dy in range(3) for dx in range(3)]
    patches = jnp.concatenate(cols, axis=-1).astype(jnp.bfloat16)  # (RB*P*P, 9*Cin)
    acc = jnp.dot(patches, w_ref[...], preferred_element_type=jnp.float32)
    acc = jnp.maximum(acc + b_ref[...], 0.0)                       # bias + ReLU in f32
    o_ref[...] = acc.reshape(RB, P, P, Cout).astype(o_ref.dtype)


def conv3x3_relu(x, w_flat, b):
    """x: (R, P, P, Cin) bf16 NHWC; w_flat: (9*Cin, Cout) bf16; b: (1, Cout) f32.
    3x3 conv, stride 1, pad 1, fused ReLU; output bf16."""
    R, P, _, Cin = x.shape
    Cout = w_flat.shape[-1]
    r_block = _pick_r_block(R, P)
    xp = jnp.pad(x, ((0, 0), (1, 1), (1, 1), (0, 0)))
    return pl.pallas_call(
        _conv3x3_relu_kernel,
        out_shape=jax.ShapeDtypeStruct((R, P, P, Cout), jnp.bfloat16),
        grid_spec=pltpu.PrefetchScalarGridSpec(
            num_scalar_prefetch=0,
            grid=(R // r_block,),
            in_specs=[
                pl.BlockSpec((r_block, P + 2, P + 2, Cin), lambda i: (i, 0, 0, 0)),
                pl.BlockSpec((9 * Cin, Cout), lambda i: (0, 0)),
                pl.BlockSpec((1, Cout), lambda i: (0, 0)),
            ],
            out_specs=pl.BlockSpec((r_block, P, P, Cout), lambda i: (i, 0, 0, 0)),
        ),
        compiler_params=pltpu.CompilerParams(
            dimension_semantics=("parallel",),
            vmem_limit_bytes=_VMEM_LIMIT),
    )(xp, w_flat, b)


def _predictor_kernel(x_ref, wd_ref, bd_ref, wpT_ref, bp_ref, o_ref):
    # x_ref : (bm, D) bf16 flattened conv features
    # wd_ref: (D, 4*D) bf16 deconv taps, bd_ref: (1, 4*D) f32
    # wpT_ref: (4*nO, 4*D) bf16 block-diagonal per-tap 1x1 weights (transposed)
    # bp_ref: (4*nO, 1) f32, o_ref: (4*nO, bm) f32 (lane-dense, transposed)
    h = jnp.dot(x_ref[...], wd_ref[...], preferred_element_type=jnp.float32)
    h = jnp.maximum(h + bd_ref[...], 0.0).astype(jnp.bfloat16)      # deconv + ReLU
    # 1x1 projection per tap, computed in "NT" orientation so the result is
    # (4*num_outputs, bm): lane axis = rows -> lane-dense store.
    logits = jax.lax.dot_general(
        wpT_ref[...], h, (((1,), (1,)), ((), ())),
        preferred_element_type=jnp.float32)
    logits = logits + bp_ref[...]
    # sigmoid via EUP exp + approx reciprocal (post_processor, fused)
    o_ref[...] = pl.reciprocal(1.0 + jnp.exp(-logits), approx=True)


def fused_predictor(feats, deconv_w, deconv_b, pred_wT, pred_b, *, num_outputs,
                    target_rows=512):
    """feats: (R, P, P, D) bf16.  Returns sigmoid probabilities, transposed:
    (4*num_outputs, R*P*P) f32, rows ordered (tap, out_channel)."""
    R, P, _, D = feats.shape
    M = R * P * P
    x2 = feats.reshape(M, D)
    M128 = _round_up(M, 128)
    n_steps = max(2, _cdiv(M128, target_rows)) if M128 >= 256 else 1
    bm = _round_up(_cdiv(M128, n_steps), 128)
    Mp = _round_up(M, bm)
    if Mp != M:
        x2 = jnp.pad(x2, ((0, Mp - M), (0, 0)))
    out_T = pl.pallas_call(
        _predictor_kernel,
        out_shape=jax.ShapeDtypeStruct((4 * num_outputs, Mp), jnp.float32),
        grid_spec=pltpu.PrefetchScalarGridSpec(
            num_scalar_prefetch=0,
            grid=(Mp // bm,),
            in_specs=[
                pl.BlockSpec((bm, D), lambda i: (i, 0)),
                pl.BlockSpec(deconv_w.shape, lambda i: (0, 0)),
                pl.BlockSpec(deconv_b.shape, lambda i: (0, 0)),
                pl.BlockSpec(pred_wT.shape, lambda i: (0, 0)),
                pl.BlockSpec(pred_b.shape, lambda i: (0, 0)),
            ],
            out_specs=pl.BlockSpec((4 * num_outputs, bm), lambda i: (0, i)),
        ),
        compiler_params=pltpu.CompilerParams(
            dimension_semantics=("parallel",),
            vmem_limit_bytes=_VMEM_LIMIT),
    )(x2, deconv_w, deconv_b, pred_wT, pred_b)
    return out_T[:, :M]


# ----------------------- plain-JAX glue (ROIAlign) ---------------------------
# TODO(synk): exact torchvision/maskrcnn ROIAlign (sampling_ratio averaging,
#             aligned/half-pixel offset, zero-extension at borders) and a Pallas
#             scalar-prefetch + manual-DMA gather version are not implemented;
#             this is a single-sample bilinear pooler done with one fused
#             4-corner XLA gather for the whole ROI batch.

def roi_align_nhwc(feat, rois, out_size, spatial_scale=1.0):
    """feat: (N, H, W, C) NHWC f32; rois: (R, 5) = [batch_idx, x1, y1, x2, y2]."""
    N, H, W, C = feat.shape
    R = rois.shape[0]
    P = out_size
    b = rois[:, 0].astype(jnp.int32)
    x1 = rois[:, 1] * spatial_scale
    y1 = rois[:, 2] * spatial_scale
    x2 = rois[:, 3] * spatial_scale
    y2 = rois[:, 4] * spatial_scale
    rw = jnp.maximum(x2 - x1, 1.0)
    rh = jnp.maximum(y2 - y1, 1.0)
    centers = (jnp.arange(P, dtype=jnp.float32) + 0.5) / P
    ys = y1[:, None] + centers[None, :] * rh[:, None]          # (R, P)
    xs = x1[:, None] + centers[None, :] * rw[:, None]          # (R, P)
    y0f = jnp.clip(jnp.floor(ys), 0.0, H - 1.0)
    x0f = jnp.clip(jnp.floor(xs), 0.0, W - 1.0)
    wy = jnp.clip(ys - y0f, 0.0, 1.0)
    wx = jnp.clip(xs - x0f, 0.0, 1.0)
    y0 = y0f.astype(jnp.int32)
    x0 = x0f.astype(jnp.int32)
    y1i = jnp.minimum(y0 + 1, H - 1)
    x1i = jnp.minimum(x0 + 1, W - 1)
    flat = feat.reshape(N * H * W, C)
    base = (b * (H * W))[:, None, None]                        # (R, 1, 1)

    def gather(yi, xi):                                        # (R,P),(R,P)->(R,P,P,C)
        idx = base + yi[:, :, None] * W + xi[:, None, :]
        return jnp.take(flat, idx.reshape(-1), axis=0).reshape(R, P, P, C)

    v00, v01 = gather(y0, x0), gather(y0, x1i)
    v10, v11 = gather(y1i, x0), gather(y1i, x1i)
    wy_ = wy[:, :, None, None]
    wx_ = wx[:, None, :, None]
    return (v00 * (1 - wy_) * (1 - wx_) + v01 * (1 - wy_) * wx_
            + v10 * wy_ * (1 - wx_) + v11 * wy_ * wx_)


# ------------------------------- the head ------------------------------------

class ROIUBHeadPallas:
    """Inference-path ROIUBHead (use_gaussian=False -> 4-tuple return)."""

    def __init__(self, key, in_channels, conv_dim, num_convs,
                 pooler_resolution, num_outputs):
        self.pooler_resolution = pooler_resolution
        self.conv_dim = conv_dim
        self.num_outputs = num_outputs
        self.use_gaussian = False

        ks = jax.random.split(key, 2 * num_convs + 4)
        self.conv_ws, self.conv_bs = [], []
        cin = in_channels
        for i in range(num_convs):
            w = 0.1 * jax.random.normal(ks[2 * i], (3, 3, cin, conv_dim), jnp.float32)
            # im2col layout: rows ordered (dy, dx, cin) to match the in-kernel concat.
            self.conv_ws.append(w.reshape(9 * cin, conv_dim).astype(jnp.bfloat16))
            self.conv_bs.append(
                (0.05 * jax.random.normal(ks[2 * i + 1], (conv_dim,), jnp.float32)
                 ).reshape(1, conv_dim))
            cin = conv_dim

        # ConvTranspose2d(conv_dim, conv_dim, k=2, s=2): torch weight (Cin, Cout, 2, 2)
        wt = 0.1 * jax.random.normal(ks[2 * num_convs],
                                     (conv_dim, conv_dim, 2, 2), jnp.float32)
        # flatten taps: w[ci, (i*2+j)*Cout + co] = wt[ci, co, i, j]
        self.deconv_w = (jnp.transpose(wt, (0, 2, 3, 1))
                         .reshape(conv_dim, 4 * conv_dim).astype(jnp.bfloat16))
        db = 0.05 * jax.random.normal(ks[2 * num_convs + 1], (conv_dim,), jnp.float32)
        self.deconv_b = jnp.tile(db, 4).reshape(1, 4 * conv_dim)          # f32

        # 1x1 conv predictor to num_outputs (ub / vertical) maps, applied per tap:
        # block-diagonal transposed weight (4*num_out, 4*conv_dim).
        pw = 0.1 * jax.random.normal(ks[2 * num_convs + 2],
                                     (conv_dim, num_outputs), jnp.float32)
        self.pred_wT = jnp.kron(jnp.eye(4, dtype=jnp.float32), pw.T).astype(jnp.bfloat16)
        pb = 0.05 * jax.random.normal(ks[2 * num_convs + 3],
                                      (num_outputs,), jnp.float32)
        self.pred_b = jnp.tile(pb, 4).reshape(4 * num_outputs, 1)         # f32

    def __call__(self, features, proposals):
        """features: (N, C, H, W) NCHW; proposals: (R, 5)=[batch_idx,x1,y1,x2,y2]."""
        R = proposals.shape[0]
        P = self.pooler_resolution
        if R == 0:   # matches `if x.shape[0] == 0` early return in PyTorch
            x_empty = jnp.zeros((0, self.conv_dim, P, P), jnp.float32)
            return x_empty, proposals, {}, {}

        feat = jnp.transpose(features, (0, 2, 3, 1))                 # NCHW -> NHWC
        pooled = roi_align_nhwc(feat, proposals, P).astype(jnp.bfloat16)

        # feature extractor conv tower (Pallas, im2col + bf16 MXU / f32 accumulate)
        # TODO(synk): the tower could be fused into one pallas_call keeping tiles
        #             resident in VMEM across layers (saves num_convs-1 HBM round
        #             trips); kept per-layer so halo padding stays on the simple
        #             wrapper-side jnp.pad path.
        x = pooled
        for w, b in zip(self.conv_ws, self.conv_bs):
            x = conv3x3_relu(x, w, b)                                # (R, P, P, D) bf16

        # predictor + post_processor: fused deconv + ReLU + 1x1 + sigmoid kernel;
        # output comes back transposed & lane-dense as (4*num_out, R*P*P).
        nO = self.num_outputs
        probs_T = fused_predictor(x, self.deconv_w, self.deconv_b,
                                  self.pred_wT, self.pred_b, num_outputs=nO)
        # tiny sub-pixel interleave (tap -> 2x2 spatial) done in XLA
        probs = (probs_T.reshape(2, 2, nO, R, P, P)
                 .transpose(3, 2, 4, 0, 5, 1)
                 .reshape(R, nO, 2 * P, 2 * P))

        x_out = jnp.transpose(x.astype(jnp.float32), (0, 3, 1, 2))   # NCHW f32
        # TODO(synk): BoxList bookkeeping (keep_only_positive_boxes, loss_evaluator,
        #             pasting results back onto boxes) is host-side Python; eval path
        #             returns the predicted probability maps as `result` instead.
        result = probs
        return x_out, result, {}, {}


# --------------------------------- main ---------------------------------------

if __name__ == "__main__":
    key = jax.random.PRNGKey(0)
    k_feat, k_box, k_param = jax.random.split(key, 3)

    N, C, H, W = 2, 16, 16, 16          # feature map (NCHW)
    R = 8                               # number of proposals (positive boxes)
    P = 8                               # pooler resolution

    features = jax.random.normal(k_feat, (N, C, H, W), jnp.float32)

    # proposals in feature-map coordinates: [batch_idx, x1, y1, x2, y2]
    c = jax.random.uniform(k_box, (R, 4), minval=2.0, maxval=12.0)
    x1 = jnp.minimum(c[:, 0], c[:, 2])
    x2 = jnp.maximum(c[:, 0], c[:, 2]) + 2.0
    y1 = jnp.minimum(c[:, 1], c[:, 3])
    y2 = jnp.maximum(c[:, 1], c[:, 3]) + 2.0
    batch_idx = (jnp.arange(R) % N).astype(jnp.float32)
    proposals = jnp.stack([batch_idx, x1, y1, x2, y2], axis=1)

    head = ROIUBHeadPallas(k_param, in_channels=C, conv_dim=32, num_convs=2,
                           pooler_resolution=P, num_outputs=2)

    x, result, loss_ub, loss_vertical = head(features, proposals)
    jax.block_until_ready((x, result))

    assert x.shape == (R, 32, P, P)
    assert result.shape == (R, 2, 2 * P, 2 * P)
    assert loss_ub == {} and loss_vertical == {}
    print("KERNEL_OK")
</pallas_src>

<mosaic_0001>
module attributes {stable_mosaic.version = 11 : i64} {
  func.func @_conv3x3_relu_kernel(%arg0: i32, %arg1: memref<4x10x10x16xbf16, #tpu.memory_space<vmem>>, %arg2: memref<144x32xbf16, #tpu.memory_space<vmem>>, %arg3: memref<1x32xf32, #tpu.memory_space<vmem>>, %arg4: memref<4x8x8x32xbf16, #tpu.memory_space<vmem>>) attributes {dimension_semantics = [#tpu.dimension_semantics<parallel>], iteration_bounds = array<i64: 2>, scalar_prefetch = 0 : i64, scratch_operands = 0 : i64, tpu.core_type = #tpu.core_type<tc>, window_params = [{transform_indices = @transform_0, window_bounds = array<i64: 4, 10, 10, 16>}, {pipeline_mode = #tpu.pipeline_mode<synchronous>, transform_indices = @transform_1, window_bounds = array<i64: 144, 32>}, {pipeline_mode = #tpu.pipeline_mode<synchronous>, transform_indices = @transform_2, window_bounds = array<i64: 1, 32>}, {transform_indices = @transform_3, window_bounds = array<i64: 4, 8, 8, 32>}]} {
    %c0 = arith.constant 0 : index
    %c0_0 = arith.constant 0 : index
    %c0_1 = arith.constant 0 : index
    %c0_2 = arith.constant 0 : index
    %0 = vector.load %arg1[%c0, %c0_0, %c0_1, %c0_2] : memref<4x10x10x16xbf16, #tpu.memory_space<vmem>>, vector<4x10x10x16xbf16>
    %1 = arith.extf %0 : vector<4x10x10x16xbf16> to vector<4x10x10x16xf32>
    %2 = vector.extract_strided_slice %1 {offsets = [0, 0, 0, 0], sizes = [4, 8, 8, 16], strides = [1, 1, 1, 1]} : vector<4x10x10x16xf32> to vector<4x8x8x16xf32>
    %3 = vector.shape_cast %2 : vector<4x8x8x16xf32> to vector<256x16xf32>
    %4 = vector.extract_strided_slice %1 {offsets = [0, 0, 1, 0], sizes = [4, 8, 8, 16], strides = [1, 1, 1, 1]} : vector<4x10x10x16xf32> to vector<4x8x8x16xf32>
    %5 = vector.shape_cast %4 : vector<4x8x8x16xf32> to vector<256x16xf32>
    %6 = vector.extract_strided_slice %1 {offsets = [0, 0, 2, 0], sizes = [4, 8, 8, 16], strides = [1, 1, 1, 1]} : vector<4x10x10x16xf32> to vector<4x8x8x16xf32>
    %7 = vector.shape_cast %6 : vector<4x8x8x16xf32> to vector<256x16xf32>
    %8 = vector.extract_strided_slice %1 {offsets = [0, 1, 0, 0], sizes = [4, 8, 8, 16], strides = [1, 1, 1, 1]} : vector<4x10x10x16xf32> to vector<4x8x8x16xf32>
    %9 = vector.shape_cast %8 : vector<4x8x8x16xf32> to vector<256x16xf32>
    %10 = vector.extract_strided_slice %1 {offsets = [0, 1, 1, 0], sizes = [4, 8, 8, 16], strides = [1, 1, 1, 1]} : vector<4x10x10x16xf32> to vector<4x8x8x16xf32>
    %11 = vector.shape_cast %10 : vector<4x8x8x16xf32> to vector<256x16xf32>
    %12 = vector.extract_strided_slice %1 {offsets = [0, 1, 2, 0], sizes = [4, 8, 8, 16], strides = [1, 1, 1, 1]} : vector<4x10x10x16xf32> to vector<4x8x8x16xf32>
    %13 = vector.shape_cast %12 : vector<4x8x8x16xf32> to vector<256x16xf32>
    %14 = vector.extract_strided_slice %1 {offsets = [0, 2, 0, 0], sizes = [4, 8, 8, 16], strides = [1, 1, 1, 1]} : vector<4x10x10x16xf32> to vector<4x8x8x16xf32>
    %15 = vector.shape_cast %14 : vector<4x8x8x16xf32> to vector<256x16xf32>
    %16 = vector.extract_strided_slice %1 {offsets = [0, 2, 1, 0], sizes = [4, 8, 8, 16], strides = [1, 1, 1, 1]} : vector<4x10x10x16xf32> to vector<4x8x8x16xf32>
    %17 = vector.shape_cast %16 : vector<4x8x8x16xf32> to vector<256x16xf32>
    %18 = vector.extract_strided_slice %1 {offsets = [0, 2, 2, 0], sizes = [4, 8, 8, 16], strides = [1, 1, 1, 1]} : vector<4x10x10x16xf32> to vector<4x8x8x16xf32>
    %19 = vector.shape_cast %18 : vector<4x8x8x16xf32> to vector<256x16xf32>
    %20 = tpu.concatenate %3, %5, %7, %9, %11, %13, %15, %17, %19 in 1 : vector<256x16xf32>, vector<256x16xf32>, vector<256x16xf32>, vector<256x16xf32>, vector<256x16xf32>, vector<256x16xf32>, vector<256x16xf32>, vector<256x16xf32>, vector<256x16xf32> -> vector<256x144xf32>
    %21 = arith.truncf %20 : vector<256x144xf32> to vector<256x144xbf16>
    %c0_3 = arith.constant 0 : index
    %c0_4 = arith.constant 0 : index
    %22 = vector.load %arg2[%c0_3, %c0_4] : memref<144x32xbf16, #tpu.memory_space<vmem>>, vector<144x32xbf16>
    %cst = arith.constant dense<0.000000e+00> : vector<256x32xf32>
    %23 = tpu.matmul %21, %22, %cst {dimension_numbers = #tpu.dot_dimension_numbers<[1], [0], [0], [1], [0, 0, 1, 1], [], []>} : vector<256x144xbf16>, vector<144x32xbf16>, vector<256x32xf32> -> vector<256x32xf32>
    %c0_5 = arith.constant 0 : index
    %c0_6 = arith.constant 0 : index
    %24 = vector.load %arg3[%c0_5, %c0_6] : memref<1x32xf32, #tpu.memory_space<vmem>>, vector<1x32xf32>
    %25 = vector.broadcast %24 : vector<1x32xf32> to vector<256x32xf32>
    %26 = arith.addf %23, %25 : vector<256x32xf32>
    %cst_7 = arith.constant 0.000000e+00 : f32
    %27 = vector.broadcast %cst_7 : f32 to vector<256x32xf32>
    %28 = arith.maximumf %26, %27 : vector<256x32xf32>
    %29 = vector.shape_cast %28 : vector<256x32xf32> to vector<4x8x8x32xf32>
    %30 = arith.truncf %29 : vector<4x8x8x32xf32> to vector<4x8x8x32xbf16>
    %c0_8 = arith.constant 0 : index
    %c0_9 = arith.constant 0 : index
    %c0_10 = arith.constant 0 : index
    %c0_11 = arith.constant 0 : index
    %31 = vector.load %arg4[%c0_8, %c0_9, %c0_10, %c0_11] : memref<4x8x8x32xbf16, #tpu.memory_space<vmem>>, vector<4x8x8x32xbf16>
    tpu.vector_store %arg4[%c0_8, %c0_9, %c0_10, %c0_11], %30 {strides = array<i32>} : memref<4x8x8x32xbf16, #tpu.memory_space<vmem>>, vector<4x8x8x32xbf16>,
    return
  }
  func.func @transform_0(%arg0: i32) -> (i32, i32, i32, i32) {
    %c0_i32 = arith.constant 0 : i32
    %c0_i32_0 = arith.constant 0 : i32
    %c0_i32_1 = arith.constant 0 : i32
    %c0_i32_2 = arith.constant 0 : i32
    return %arg0, %c0_i32, %c0_i32_0, %c0_i32_1 : i32, i32, i32, i32
  }
  func.func @transform_1(%arg0: i32) -> (i32, i32) {
    %c0_i32 = arith.constant 0 : i32
    %c0_i32_0 = arith.constant 0 : i32
    %c0_i32_1 = arith.constant 0 : i32
    return %c0_i32, %c0_i32_0 : i32, i32
  }
  func.func @transform_2(%arg0: i32) -> (i32, i32) {
    %c0_i32 = arith.constant 0 : i32
    %c0_i32_0 = arith.constant 0 : i32
    %c0_i32_1 = arith.constant 0 : i32
    return %c0_i32, %c0_i32_0 : i32, i32
  }
  func.func @transform_3(%arg0: i32) -> (i32, i32, i32, i32) {
    %c0_i32 = arith.constant 0 : i32
    %c0_i32_0 = arith.constant 0 : i32
    %c0_i32_1 = arith.constant 0 : i32
    %c0_i32_2 = arith.constant 0 : i32
    return %arg0, %c0_i32, %c0_i32_0, %c0_i32_1 : i32, i32, i32, i32
  }
}

</mosaic_0001>

<llo_original>
// kernel: tpu_custom_call.1
$region0: #{tpu_custom_call.1}
  #allocation0 [shape = 'u32[]', space=smem, size = 0x4, offset = 0x4, fixed_abs, tag = 'smem constant byte address 0x4 - core index']
  #allocation1 [shape = 'u32[144,128]{1,0:T(1,128)}', space=vmem, size = 0x12000, scoped, tag = 'internal scratch']
  %s0 = inlined_call_operand.vmem [shape: bf16[8,10,10,16], index: 0, kind: input, shape index: {}]
  %s1 = inlined_call_operand.vmem [shape: bf16[144,32], index: 1, kind: input, shape index: {}]
  %s2 = inlined_call_operand.vmem [shape: f32[1,32], index: 2, kind: input, shape index: {}]
  %s3 = inlined_call_operand.hbm [shape: bf16[8,8,8,32], index: 3, kind: output, shape index: {}]
  %s4 = sld [smem:[#allocation0]]
  $region45: #{tpu_custom_call.1} parent=0
    _
  %s6 = ssub.s32 1, %s4
  %s7 = scalar_select 0, %s6, %s4
  $region1: #{tpu_custom_call.1} parent=0
    #allocation2 [shape = 'u8[131072]{0}', space=vmem, size = 0x20000, scoped, tag = 'output window, operand 0']
    #allocation3 [shape = 's32[2]{0}', space=sflag, size = 0x8, scoped, tag = 'scoped memory for tpu_custom_call.1']
    %8 = vsyncpa [#allocation3], 0
    %s9 = scalar_lea.sflag [#allocation3], 1
    %10 = vsyncpa %s9, 0
    loop: start=0, step=1, limit=4
    $region2: #{tpu_custom_call.1} parent=1 // loop_pre_header
      _
    $region3: #{tpu_custom_call.1} parent=1 // loop_header
      %s12 = sphi 0, %s16
      %p13 = scmp.ge.s32.totalorder %s12, 4
      %s22 = sphi 0, %s24
      %s25 = sphi 0, %s22
      %s26 = sphi 0, %s25
      %s42 = sphi 0, %s26
      %s46 = sphi 0, %s46
      %s48 = sphi 0, %s46
      %s49 = sphi 0, %s48
      %s63 = sphi 0, %s49
      %s67 = sphi 0, %s67
      %s69 = sphi 0, %s67
      %s70 = sphi 0, %s69
      %s84 = sphi 0, %s70
      %s90 = sphi 0, %s92
      %s93 = sphi 0, %s90
      %s94 = sphi 0, %s93
      %s110 = sphi 0, %s94
    $region4: #{tpu_custom_call.1} parent=1 // loop_header_branch
      %15 = sbr.rel (%p13) target = $region8
    $region5: #{tpu_custom_call.1} parent=1 // loop_body
      %s17 = ssub.s32 %s12, 1
      %s18 = ssub.s32 %s12, 2
      %s19 = sadd.s32 %s12, 1
      %s20 = ssub.s32 %s12, %s19
      %p21 = scmp.eq.s32.totalorder %s20, 0
      %s23 = sadd.s32 %s22, 1
      %s24 = scalar_select %p21, %s22, %s23
      %p27 = pneg %p21
      %p28 = scmp.eq.s32.totalorder %s12, 1
      %p29 = por %p27, %p28
      %p30 = scmp.ne.s32.totalorder %s22, %s25
      %p31 = scmp.eq.s32.totalorder %s12, 0
      %p32 = por %p30, %p31
      %p33 = scmp.ne.s32.totalorder %s22, %s25
      %p34 = scmp.eq.s32.totalorder %s17, 1
      %p35 = por %p33, %p34
      %p36 = scmp.ne.s32.totalorder %s25, %s26
      %p37 = scmp.eq.s32.totalorder %s17, 0
      %p38 = por %p36, %p37
      %p39 = scmp.ne.s32.totalorder %s25, %s26
      %p40 = scmp.eq.s32.totalorder %s18, 1
      %p41 = por %p39, %p40
      %p43 = scmp.ne.s32.totalorder %s26, %s42
      %p44 = scmp.eq.s32.totalorder %s18, 0
      %p45 = por %p43, %p44
      %s47 = sadd.s32 %s46, 1
      %p50 = scmp.eq.s32.totalorder %s12, 1
      %p51 = scmp.ne.s32.totalorder %s46, %s48
      %p52 = scmp.eq.s32.totalorder %s12, 0
      %p53 = por %p51, %p52
      %p54 = scmp.ne.s32.totalorder %s46, %s48
      %p55 = scmp.eq.s32.totalorder %s17, 1
      %p56 = por %p54, %p55
      %p57 = scmp.ne.s32.totalorder %s48, %s49
      %p58 = scmp.eq.s32.totalorder %s17, 0
      %p59 = por %p57, %p58
      %p60 = scmp.ne.s32.totalorder %s48, %s49
      %p61 = scmp.eq.s32.totalorder %s18, 1
      %p62 = por %p60, %p61
      %p64 = scmp.ne.s32.totalorder %s49, %s63
      %p65 = scmp.eq.s32.totalorder %s18, 0
      %p66 = por %p64, %p65
      %s68 = sadd.s32 %s67, 1
      %p71 = scmp.eq.s32.totalorder %s12, 1
      %p72 = scmp.ne.s32.totalorder %s67, %s69
      %p73 = scmp.eq.s32.totalorder %s12, 0
      %p74 = por %p72, %p73
      %p75 = scmp.ne.s32.totalorder %s67, %s69
      %p76 = scmp.eq.s32.totalorder %s17, 1
      %p77 = por %p75, %p76
      %p78 = scmp.ne.s32.totalorder %s69, %s70
      %p79 = scmp.eq.s32.totalorder %s17, 0
      %p80 = por %p78, %p79
      %p81 = scmp.ne.s32.totalorder %s69, %s70
      %p82 = scmp.eq.s32.totalorder %s18, 1
      %p83 = por %p81, %p82
      %p85 = scmp.ne.s32.totalorder %s70, %s84
      %p86 = scmp.eq.s32.totalorder %s18, 0
      %p87 = por %p85, %p86
      %s88 = ssub.s32 %s12, %s19
      %p89 = scmp.eq.s32.totalorder %s88, 0
      %s91 = sadd.s32 %s90, 1
      %s92 = scalar_select %p89, %s90, %s91
      %p95 = pneg %p89
      %p96 = scmp.eq.s32.totalorder %s12, 1
      %p97 = por %p95, %p96
      %p98 = scmp.ne.s32.totalorder %s90, %s93
      %p99 = scmp.eq.s32.totalorder %s12, 0
      %p100 = por %p98, %p99
      %p101 = scmp.ne.s32.totalorder %s90, %s93
      %p102 = scmp.eq.s32.totalorder %s17, 1
      %p103 = por %p101, %p102
      %p104 = scmp.ne.s32.totalorder %s93, %s94
      %p105 = scmp.eq.s32.totalorder %s17, 0
      %p106 = por %p104, %p105
      %p107 = scmp.ne.s32.totalorder %s93, %s94
      %p108 = scmp.eq.s32.totalorder %s18, 1
      %p109 = por %p107, %p108
      %p111 = scmp.ne.s32.totalorder %s94, %s110
      %p112 = scmp.eq.s32.totalorder %s18, 0
      %p113 = por %p111, %p112
      %p114 = scmp.le.s32.totalorder 1, %s12
      %p115 = scmp.lt.s32.totalorder %s12, 3
      %p116 = pnand %p114, %p115
      %p117 = pneg %p116
      // Predicated region
      $region9: #{tpu_custom_call.1} parent=5 // pred_check
        _
      $region10: #{tpu_custom_call.1} parent=5 // pred_check_branch
        %119 = sbr.rel (%p116) target = $region12
      $region11: #{tpu_custom_call.1} parent=5 // pred_region
        %s120 = ssub.s32 %s12, 1
        // Predicated region
        $region13: #{tpu_custom_call.1} parent=11 // pred_check
          %p121 = pneg %p59
        $region14: #{tpu_custom_call.1} parent=11 // pred_check_branch
          %123 = sbr.rel (%p121) target = $region16
        $region15: #{tpu_custom_call.1} parent=11 // pred_region
          _
        $region16: #{tpu_custom_call.1} parent=11 // pred_fallthru
          _
        // Predicated region
        $region17: #{tpu_custom_call.1} parent=11 // pred_check
          %p124 = pneg %p80
        $region18: #{tpu_custom_call.1} parent=11 // pred_check_branch
          %126 = sbr.rel (%p124) target = $region20
        $region19: #{tpu_custom_call.1} parent=11 // pred_region
          _
        $region20: #{tpu_custom_call.1} parent=11 // pred_fallthru
          _
      $region12: #{tpu_custom_call.1} parent=5 // pred_fallthru
        _
      %p127 = scmp.lt.s32.totalorder %s12, 2
      // Predicated region
      $region21: #{tpu_custom_call.1} parent=5 // pred_check
        %p128 = pneg %p127
      $region22: #{tpu_custom_call.1} parent=5 // pred_check_branch
        %130 = sbr.rel (%p128) target = $region24
      $region23: #{tpu_custom_call.1} parent=5 // pred_region
        // Predicated region
        $region25: #{tpu_custom_call.1} parent=23 // pred_check
          %p131 = pneg %p32
        $region26: #{tpu_custom_call.1} parent=23 // pred_check_branch
          %133 = sbr.rel (%p131) target = $region28
        $region27: #{tpu_custom_call.1} parent=23 // pred_region
          %s134 = smul.u32 4, %s12
          %p135 = scmp.lt.s32.totalorder %s134, 7
          %s136 = scalar_select %p135, %s134, 7
          %s137 = smul.addr %s136, 20
          %s138 = smul.addr %s137, 4
          %s139 = scalar_lea.vmem %s0, %s138
          %s140 = smul.u32 4, %s12
        $region28: #{tpu_custom_call.1} parent=23 // pred_fallthru
          _
      $region24: #{tpu_custom_call.1} parent=5 // pred_fallthru
        _
      %p141 = scmp.le.s32.totalorder 1, %s12
      %p142 = scmp.lt.s32.totalorder %s12, 3
      %p143 = pnand %p141, %p142
      %p144 = pneg %p143
      // Predicated region
      $region29: #{tpu_custom_call.1} parent=5 // pred_check
        _
      $region30: #{tpu_custom_call.1} parent=5 // pred_check_branch
        %146 = sbr.rel (%p143) target = $region32
      $region31: #{tpu_custom_call.1} parent=5 // pred_region
        %s147 = ssub.s32 %s12, 1
        %s148 = smul.u32 4, %s17
        %p149 = scmp.lt.s32.totalorder %s148, 7
        %s150 = scalar_select %p149, %s148, 7
        %s151 = smul.addr %s150, 20
        %s152 = smul.addr %s151, 4
        %s153 = scalar_lea.vmem %s0, %s152
        %p154 = pneg %p38
        %p155 = pneg %p35
        %p156 = pneg %p59
        %p157 = pneg %p56
        %p158 = pneg %p80
        %p159 = pneg %p77
        %p160 = pneg %p106
        %p161 = pneg %p103
        %s162 = sand.u32 %s93, 1
        %s163 = scalar_lea.sflag [#allocation3], %s162
        %s164 = sand.u32 %s93, 1
        %s165 = smul.addr %s164, 128
        %s166 = scalar_lea.vmem [#allocation2], %s165
        %s167 = smul.u32 4, %s17
        %p168 = scmp.lt.s32.totalorder %s167, 7
        %s169 = scalar_select %p168, %s167, 7
        %s170 = smul.addr %s169, 20
        %s171 = smul.addr %s170, 4
        %s172 = scalar_lea.vmem %s0, %s171
        %s173 = smul.u32 4, %s17
        %s174 = smul.u32 4, %s17
        %v176 = vld [vmem:[%s172] sm:$0xf]
        %v177 = vld [vmem:[%s172 + $0x4] sm:$0x1]
        %v178 = vld [vmem:[%s172 + $0x8] sm:$0xf]
        %v179 = vld [vmem:[%s172 + $0xc] sm:$0x1]
        %v180 = vld [vmem:[%s172 + $0x10] sm:$0xf]
        %v181 = vld [vmem:[%s172 + $0x14] sm:$0x1]
        %v182 = vld [vmem:[%s172 + $0x18] sm:$0xf]
        %v183 = vld [vmem:[%s172 + $0x1c] sm:$0x1]
        %v184 = vld [vmem:[%s172 + $0x20] sm:$0xf]
        %v185 = vld [vmem:[%s172 + $0x24] sm:$0x1]
        %v186 = vld [vmem:[%s172 + $0x28] sm:$0xf]
        %v187 = vld [vmem:[%s172 + $0x2c] sm:$0x1]
        %v188 = vld [vmem:[%s172 + $0x30] sm:$0xf]
        %v189 = vld [vmem:[%s172 + $0x34] sm:$0x1]
        %v190 = vld [vmem:[%s172 + $0x38] sm:$0xf]
        %v191 = vld [vmem:[%s172 + $0x3c] sm:$0x1]
        %v192 = vld [vmem:[%s172 + $0x40] sm:$0xf]
        %v193 = vld [vmem:[%s172 + $0x44] sm:$0x1]
        %v194 = vld [vmem:[%s172 + $0x48] sm:$0xf]
        %v195 = vld [vmem:[%s172 + $0x4c] sm:$0x1]
        %v196 = vld [vmem:[%s172 + $0x50] sm:$0xf]
        %v197 = vld [vmem:[%s172 + $0x54] sm:$0x1]
        %v198 = vld [vmem:[%s172 + $0x58] sm:$0xf]
        %v199 = vld [vmem:[%s172 + $0x5c] sm:$0x1]
        %v200 = vld [vmem:[%s172 + $0x60] sm:$0xf]
        %v201 = vld [vmem:[%s172 + $0x64] sm:$0x1]
        %v202 = vld [vmem:[%s172 + $0x68] sm:$0xf]
        %v203 = vld [vmem:[%s172 + $0x6c] sm:$0x1]
        %v204 = vld [vmem:[%s172 + $0x70] sm:$0xf]
        %v205 = vld [vmem:[%s172 + $0x74] sm:$0x1]
        %v206 = vld [vmem:[%s172 + $0x78] sm:$0xf]
        %v207 = vld [vmem:[%s172 + $0x7c] sm:$0x1]
        %v208 = vld [vmem:[%s172 + $0x80] sm:$0xf]
        %v209 = vld [vmem:[%s172 + $0x84] sm:$0x1]
        %v210 = vld [vmem:[%s172 + $0x88] sm:$0xf]
        %v211 = vld [vmem:[%s172 + $0x8c] sm:$0x1]
        %v212 = vld [vmem:[%s172 + $0x90] sm:$0xf]
        %v213 = vld [vmem:[%s172 + $0x94] sm:$0x1]
        %v214 = vld [vmem:[%s172 + $0x98] sm:$0xf]
        %v215 = vld [vmem:[%s172 + $0x9c] sm:$0x1]
        %v216 = vld [vmem:[%s172 + $0xa0] sm:$0xf]
        %v217 = vld [vmem:[%s172 + $0xa4] sm:$0x1]
        %v218 = vld [vmem:[%s172 + $0xa8] sm:$0xf]
        %v219 = vld [vmem:[%s172 + $0xac] sm:$0x1]
        %v220 = vld [vmem:[%s172 + $0xb0] sm:$0xf]
        %v221 = vld [vmem:[%s172 + $0xb4] sm:$0x1]
        %v222 = vld [vmem:[%s172 + $0xb8] sm:$0xf]
        %v223 = vld [vmem:[%s172 + $0xbc] sm:$0x1]
        %v224 = vld [vmem:[%s172 + $0xc0] sm:$0xf]
        %v225 = vld [vmem:[%s172 + $0xc4] sm:$0x1]
        %v226 = vld [vmem:[%s172 + $0xc8] sm:$0xf]
        %v227 = vld [vmem:[%s172 + $0xcc] sm:$0x1]
        %v228 = vld [vmem:[%s172 + $0xd0] sm:$0xf]
        %v229 = vld [vmem:[%s172 + $0xd4] sm:$0x1]
        %v230 = vld [vmem:[%s172 + $0xd8] sm:$0xf]
        %v231 = vld [vmem:[%s172 + $0xdc] sm:$0x1]
        %v232 = vld [vmem:[%s172 + $0xe0] sm:$0xf]
        %v233 = vld [vmem:[%s172 + $0xe4] sm:$0x1]
        %v234 = vld [vmem:[%s172 + $0xe8] sm:$0xf]
        %v235 = vld [vmem:[%s172 + $0xec] sm:$0x1]
        %v236 = vld [vmem:[%s172 + $0xf0] sm:$0xf]
        %v237 = vld [vmem:[%s172 + $0xf4] sm:$0x1]
        %v238 = vld [vmem:[%s172 + $0xf8] sm:$0xf]
        %v239 = vld [vmem:[%s172 + $0xfc] sm:$0x1]
        %v240 = vld [vmem:[%s172 + $0x100] sm:$0xf]
        %v241 = vld [vmem:[%s172 + $0x104] sm:$0x1]
        %v242 = vld [vmem:[%s172 + $0x108] sm:$0xf]
        %v243 = vld [vmem:[%s172 + $0x10c] sm:$0x1]
        %v244 = vld [vmem:[%s172 + $0x110] sm:$0xf]
        %v245 = vld [vmem:[%s172 + $0x114] sm:$0x1]
        %v246 = vld [vmem:[%s172 + $0x118] sm:$0xf]
        %v247 = vld [vmem:[%s172 + $0x11c] sm:$0x1]
        %v248 = vld [vmem:[%s172 + $0x120] sm:$0xf]
        %v249 = vld [vmem:[%s172 + $0x124] sm:$0x1]
        %v250 = vld [vmem:[%s172 + $0x128] sm:$0xf]
        %v251 = vld [vmem:[%s172 + $0x12c] sm:$0x1]
        %v252 = vld [vmem:[%s172 + $0x130] sm:$0xf]
        %v253 = vld [vmem:[%s172 + $0x134] sm:$0x1]
        %v254 = vld [vmem:[%s172 + $0x138] sm:$0xf]
        %v255 = vld [vmem:[%s172 + $0x13c] sm:$0x1]
        %v256 = vunpack.c.l.bf16 %v176
        %v257 = vunpack.c.l.bf16 %v177
        %v258 = vunpack.c.l.bf16 %v178
        %v259 = vunpack.c.l.bf16 %v179
        %v260 = vunpack.c.l.bf16 %v180
        %v261 = vunpack.c.l.bf16 %v181
        %v262 = vunpack.c.l.bf16 %v182
        %v263 = vunpack.c.l.bf16 %v183
        %v264 = vunpack.c.l.bf16 %v184
        %v265 = vunpack.c.l.bf16 %v185
        %v266 = vunpack.c.l.bf16 %v186
        %v267 = vunpack.c.l.bf16 %v187
        %v268 = vunpack.c.l.bf16 %v188
        %v269 = vunpack.c.l.bf16 %v189
        %v270 = vunpack.c.l.bf16 %v190
        %v271 = vunpack.c.l.bf16 %v191
        %v272 = vunpack.c.l.bf16 %v192
        %v273 = vunpack.c.l.bf16 %v193
        %v274 = vunpack.c.l.bf16 %v194
        %v275 = vunpack.c.l.bf16 %v195
        %v276 = vunpack.c.l.bf16 %v196
        %v277 = vunpack.c.l.bf16 %v197
        %v278 = vunpack.c.l.bf16 %v198
        %v279 = vunpack.c.l.bf16 %v199
        %v280 = vunpack.c.l.bf16 %v200
        %v281 = vunpack.c.l.bf16 %v201
        %v282 = vunpack.c.l.bf16 %v202
        %v283 = vunpack.c.l.bf16 %v203
        %v284 = vunpack.c.l.bf16 %v204
        %v285 = vunpack.c.l.bf16 %v205
        %v286 = vunpack.c.l.bf16 %v206
        %v287 = vunpack.c.l.bf16 %v207
        %v288 = vunpack.c.l.bf16 %v208
        %v289 = vunpack.c.l.bf16 %v209
        %v290 = vunpack.c.l.bf16 %v210
        %v291 = vunpack.c.l.bf16 %v211
        %v292 = vunpack.c.l.bf16 %v212
        %v293 = vunpack.c.l.bf16 %v213
        %v294 = vunpack.c.l.bf16 %v214
        %v295 = vunpack.c.l.bf16 %v215
        %v296 = vunpack.c.l.bf16 %v216
        %v297 = vunpack.c.l.bf16 %v217
        %v298 = vunpack.c.l.bf16 %v218
        %v299 = vunpack.c.l.bf16 %v219
        %v300 = vunpack.c.l.bf16 %v220
        %v301 = vunpack.c.l.bf16 %v221
        %v302 = vunpack.c.l.bf16 %v222
        %v303 = vunpack.c.l.bf16 %v223
        %v304 = vunpack.c.l.bf16 %v224
        %v305 = vunpack.c.l.bf16 %v225
        %v306 = vunpack.c.l.bf16 %v226
        %v307 = vunpack.c.l.bf16 %v227
        %v308 = vunpack.c.l.bf16 %v228
        %v309 = vunpack.c.l.bf16 %v229
        %v310 = vunpack.c.l.bf16 %v230
        %v311 = vunpack.c.l.bf16 %v231
        %v312 = vunpack.c.l.bf16 %v232
        %v313 = vunpack.c.l.bf16 %v233
        %v314 = vunpack.c.l.bf16 %v234
        %v315 = vunpack.c.l.bf16 %v235
        %v316 = vunpack.c.l.bf16 %v236
        %v317 = vunpack.c.l.bf16 %v237
        %v318 = vunpack.c.l.bf16 %v238
        %v319 = vunpack.c.l.bf16 %v239
        %v320 = vunpack.c.l.bf16 %v240
        %v321 = vunpack.c.l.bf16 %v241
        %v322 = vunpack.c.l.bf16 %v242
        %v323 = vunpack.c.l.bf16 %v243
        %v324 = vunpack.c.l.bf16 %v244
        %v325 = vunpack.c.l.bf16 %v245
        %v326 = vunpack.c.l.bf16 %v246
        %v327 = vunpack.c.l.bf16 %v247
        %v328 = vunpack.c.l.bf16 %v248
        %v329 = vunpack.c.l.bf16 %v249
        %v330 = vunpack.c.l.bf16 %v250
        %v331 = vunpack.c.l.bf16 %v251
        %v332 = vunpack.c.l.bf16 %v252
        %v333 = vunpack.c.l.bf16 %v253
        %v334 = vunpack.c.l.bf16 %v254
        %v335 = vunpack.c.l.bf16 %v255
        %vm400 = vcmask 1046528
        %v401 = vrot.slane %v256, 1
        %v402 = vrot.slane %v257, 1
        %v403 = vsel %vm400, %v401, %v402
        %v404 = vrot.slane %v258, 1
        %v405 = vrot.slane %v259, 1
        %v406 = vsel %vm400, %v404, %v405
        %v407 = vrot.slane %v260, 1
        %v408 = vrot.slane %v261, 1
        %v409 = vsel %vm400, %v407, %v408
        %v410 = vrot.slane %v262, 1
        %v411 = vrot.slane %v263, 1
        %v412 = vsel %vm400, %v410, %v411
        %v413 = vrot.slane %v264, 1
        %v414 = vrot.slane %v265, 1
        %v415 = vsel %vm400, %v413, %v414
        %v416 = vrot.slane %v266, 1
        %v417 = vrot.slane %v267, 1
        %v418 = vsel %vm400, %v416, %v417
        %v419 = vrot.slane %v268, 1
        %v420 = vrot.slane %v269, 1
        %v421 = vsel %vm400, %v419, %v420
        %v422 = vrot.slane %v270, 1
        %v423 = vrot.slane %v271, 1
        %v424 = vsel %vm400, %v422, %v423
        %v425 = vrot.slane %v276, 1
        %v426 = vrot.slane %v277, 1
        %v427 = vsel %vm400, %v425, %v426
        %v428 = vrot.slane %v278, 1
        %v429 = vrot.slane %v279, 1
        %v430 = vsel %vm400, %v428, %v429
        %v431 = vrot.slane %v280, 1
        %v432 = vrot.slane %v281, 1
        %v433 = vsel %vm400, %v431, %v432
        %v434 = vrot.slane %v282, 1
        %v435 = vrot.slane %v283, 1
        %v436 = vsel %vm400, %v434, %v435
        %v437 = vrot.slane %v284, 1
        %v438 = vrot.slane %v285, 1
        %v439 = vsel %vm400, %v437, %v438
        %v440 = vrot.slane %v286, 1
        %v441 = vrot.slane %v287, 1
        %v442 = vsel %vm400, %v440, %v441
        %v443 = vrot.slane %v288, 1
        %v444 = vrot.slane %v289, 1
        %v445 = vsel %vm400, %v443, %v444
        %v446 = vrot.slane %v290, 1
        %v447 = vrot.slane %v291, 1
        %v448 = vsel %vm400, %v446, %v447
        %v449 = vrot.slane %v296, 1
        %v450 = vrot.slane %v297, 1
        %v451 = vsel %vm400, %v449, %v450
        %v452 = vrot.slane %v298, 1
        %v453 = vrot.slane %v299, 1
        %v454 = vsel %vm400, %v452, %v453
        %v455 = vrot.slane %v300, 1
        %v456 = vrot.slane %v301, 1
        %v457 = vsel %vm400, %v455, %v456
        %v458 = vrot.slane %v302, 1
        %v459 = vrot.slane %v303, 1
        %v460 = vsel %vm400, %v458, %v459
        %v461 = vrot.slane %v304, 1
        %v462 = vrot.slane %v305, 1
        %v463 = vsel %vm400, %v461, %v462
        %v464 = vrot.slane %v306, 1
        %v465 = vrot.slane %v307, 1
        %v466 = vsel %vm400, %v464, %v465
        %v467 = vrot.slane %v308, 1
        %v468 = vrot.slane %v309, 1
        %v469 = vsel %vm400, %v467, %v468
        %v470 = vrot.slane %v310, 1
        %v471 = vrot.slane %v311, 1
        %v472 = vsel %vm400, %v470, %v471
        %v473 = vrot.slane %v316, 1
        %v474 = vrot.slane %v317, 1
        %v475 = vsel %vm400, %v473, %v474
        %v476 = vrot.slane %v318, 1
        %v477 = vrot.slane %v319, 1
        %v478 = vsel %vm400, %v476, %v477
        %v479 = vrot.slane %v320, 1
        %v480 = vrot.slane %v321, 1
        %v481 = vsel %vm400, %v479, %v480
        %v482 = vrot.slane %v322, 1
        %v483 = vrot.slane %v323, 1
        %v484 = vsel %vm400, %v482, %v483
        %v485 = vrot.slane %v324, 1
        %v486 = vrot.slane %v325, 1
        %v487 = vsel %vm400, %v485, %v486
        %v488 = vrot.slane %v326, 1
        %v489 = vrot.slane %v327, 1
        %v490 = vsel %vm400, %v488, %v489
        %v491 = vrot.slane %v328, 1
        %v492 = vrot.slane %v329, 1
        %v493 = vsel %vm400, %v491, %v492
        %v494 = vrot.slane %v330, 1
        %v495 = vrot.slane %v331, 1
        %v496 = vsel %vm400, %v494, %v495
        %vm497 = vcmask 1045504
        %v498 = vrot.slane %v256, 2
        %v499 = vrot.slane %v257, 2
        %v500 = vsel %vm497, %v498, %v499
        %v501 = vrot.slane %v258, 2
        %v502 = vrot.slane %v259, 2
        %v503 = vsel %vm497, %v501, %v502
        %v504 = vrot.slane %v260, 2
        %v505 = vrot.slane %v261, 2
        %v506 = vsel %vm497, %v504, %v505
        %v507 = vrot.slane %v262, 2
        %v508 = vrot.slane %v263, 2
        %v509 = vsel %vm497, %v507, %v508
        %v510 = vrot.slane %v264, 2
        %v511 = vrot.slane %v265, 2
        %v512 = vsel %vm497, %v510, %v511
        %v513 = vrot.slane %v266, 2
        %v514 = vrot.slane %v267, 2
        %v515 = vsel %vm497, %v513, %v514
        %v516 = vrot.slane %v268, 2
        %v517 = vrot.slane %v269, 2
        %v518 = vsel %vm497, %v516, %v517
        %v519 = vrot.slane %v270, 2
        %v520 = vrot.slane %v271, 2
        %v521 = vsel %vm497, %v519, %v520
        %v522 = vrot.slane %v276, 2
        %v523 = vrot.slane %v277, 2
        %v524 = vsel %vm497, %v522, %v523
        %v525 = vrot.slane %v278, 2
        %v526 = vrot.slane %v279, 2
        %v527 = vsel %vm497, %v525, %v526
        %v528 = vrot.slane %v280, 2
        %v529 = vrot.slane %v281, 2
        %v530 = vsel %vm497, %v528, %v529
        %v531 = vrot.slane %v282, 2
        %v532 = vrot.slane %v283, 2
        %v533 = vsel %vm497, %v531, %v532
        %v534 = vrot.slane %v284, 2
        %v535 = vrot.slane %v285, 2
        %v536 = vsel %vm497, %v534, %v535
        %v537 = vrot.slane %v286, 2
        %v538 = vrot.slane %v287, 2
        %v539 = vsel %vm497, %v537, %v538
        %v540 = vrot.slane %v288, 2
        %v541 = vrot.slane %v289, 2
        %v542 = vsel %vm497, %v540, %v541
        %v543 = vrot.slane %v290, 2
        %v544 = vrot.slane %v291, 2
        %v545 = vsel %vm497, %v543, %v544
        %v546 = vrot.slane %v296, 2
        %v547 = vrot.slane %v297, 2
        %v548 = vsel %vm497, %v546, %v547
        %v549 = vrot.slane %v298, 2
        %v550 = vrot.slane %v299, 2
        %v551 = vsel %vm497, %v549, %v550
        %v552 = vrot.slane %v300, 2
        %v553 = vrot.slane %v301, 2
        %v554 = vsel %vm497, %v552, %v553
        %v555 = vrot.slane %v302, 2
        %v556 = vrot.slane %v303, 2
        %v557 = vsel %vm497, %v555, %v556
        %v558 = vrot.slane %v304, 2
        %v559 = vrot.slane %v305, 2
        %v560 = vsel %vm497, %v558, %v559
        %v561 = vrot.slane %v306, 2
        %v562 = vrot.slane %v307, 2
        %v563 = vsel %vm497, %v561, %v562
        %v564 = vrot.slane %v308, 2
        %v565 = vrot.slane %v309, 2
        %v566 = vsel %vm497, %v564, %v565
        %v567 = vrot.slane %v310, 2
        %v568 = vrot.slane %v311, 2
        %v569 = vsel %vm497, %v567, %v568
        %v570 = vrot.slane %v316, 2
        %v571 = vrot.slane %v317, 2
        %v572 = vsel %vm497, %v570, %v571
        %v573 = vrot.slane %v318, 2
        %v574 = vrot.slane %v319, 2
        %v575 = vsel %vm497, %v573, %v574
        %v576 = vrot.slane %v320, 2
        %v577 = vrot.slane %v321, 2
        %v578 = vsel %vm497, %v576, %v577
        %v579 = vrot.slane %v322, 2
        %v580 = vrot.slane %v323, 2
        %v581 = vsel %vm497, %v579, %v580
        %v582 = vrot.slane %v324, 2
        %v583 = vrot.slane %v325, 2
        %v584 = vsel %vm497, %v582, %v583
        %v585 = vrot.slane %v326, 2
        %v586 = vrot.slane %v327, 2
        %v587 = vsel %vm497, %v585, %v586
        %v588 = vrot.slane %v328, 2
        %v589 = vrot.slane %v329, 2
        %v590 = vsel %vm497, %v588, %v589
        %v591 = vrot.slane %v330, 2
        %v592 = vrot.slane %v331, 2
        %v593 = vsel %vm497, %v591, %v592
        %v602 = vrot.slane %v272, 1
        %v603 = vrot.slane %v273, 1
        %v604 = vsel %vm400, %v602, %v603
        %v605 = vrot.slane %v292, 1
        %v606 = vrot.slane %v293, 1
        %v607 = vsel %vm400, %v605, %v606
        %v608 = vrot.slane %v312, 1
        %v609 = vrot.slane %v313, 1
        %v610 = vsel %vm400, %v608, %v609
        %v611 = vrot.slane %v332, 1
        %v612 = vrot.slane %v333, 1
        %v613 = vsel %vm400, %v611, %v612
        %v614 = vrot.slane %v272, 2
        %v615 = vrot.slane %v273, 2
        %v616 = vsel %vm497, %v614, %v615
        %v617 = vrot.slane %v292, 2
        %v618 = vrot.slane %v293, 2
        %v619 = vsel %vm497, %v617, %v618
        %v620 = vrot.slane %v312, 2
        %v621 = vrot.slane %v313, 2
        %v622 = vsel %vm497, %v620, %v621
        %v623 = vrot.slane %v332, 2
        %v624 = vrot.slane %v333, 2
        %v625 = vsel %vm497, %v623, %v624
        %v634 = vrot.slane %v274, 1
        %v635 = vrot.slane %v275, 1
        %v636 = vsel %vm400, %v634, %v635
        %v637 = vrot.slane %v294, 1
        %v638 = vrot.slane %v295, 1
        %v639 = vsel %vm400, %v637, %v638
        %v640 = vrot.slane %v314, 1
        %v641 = vrot.slane %v315, 1
        %v642 = vsel %vm400, %v640, %v641
        %v643 = vrot.slane %v334, 1
        %v644 = vrot.slane %v335, 1
        %v645 = vsel %vm400, %v643, %v644
        %v646 = vrot.slane %v274, 2
        %v647 = vrot.slane %v275, 2
        %v648 = vsel %vm497, %v646, %v647
        %v649 = vrot.slane %v294, 2
        %v650 = vrot.slane %v295, 2
        %v651 = vsel %vm497, %v649, %v650
        %v652 = vrot.slane %v314, 2
        %v653 = vrot.slane %v315, 2
        %v654 = vsel %vm497, %v652, %v653
        %v655 = vrot.slane %v334, 2
        %v656 = vrot.slane %v335, 2
        %v657 = vsel %vm497, %v655, %v656
        %690 = vrot.lane.b32.xlu0 %v403, 16
        %v691 = vpop.permute.xlu0 %690
        %692 = vrot.lane.b32.xlu0 %v406, 16
        %v693 = vpop.permute.xlu0 %692
        %694 = vrot.lane.b32.xlu0 %v409, 16
        %v695 = vpop.permute.xlu0 %694
        %696 = vrot.lane.b32.xlu0 %v412, 16
        %v697 = vpop.permute.xlu0 %696
        %698 = vrot.lane.b32.xlu0 %v415, 16
        %v699 = vpop.permute.xlu0 %698
        %700 = vrot.lane.b32.xlu0 %v418, 16
        %v701 = vpop.permute.xlu0 %700
        %702 = vrot.lane.b32.xlu0 %v421, 16
        %v703 = vpop.permute.xlu0 %702
        %704 = vrot.lane.b32.xlu0 %v424, 16
        %v705 = vpop.permute.xlu0 %704
        %706 = vrot.lane.b32.xlu0 %v427, 16
        %v707 = vpop.permute.xlu0 %706
        %708 = vrot.lane.b32.xlu0 %v430, 16
        %v709 = vpop.permute.xlu0 %708
        %710 = vrot.lane.b32.xlu0 %v433, 16
        %v711 = vpop.permute.xlu0 %710
        %712 = vrot.lane.b32.xlu0 %v436, 16
        %v713 = vpop.permute.xlu0 %712
        %714 = vrot.lane.b32.xlu0 %v439, 16
        %v715 = vpop.permute.xlu0 %714
        %716 = vrot.lane.b32.xlu0 %v442, 16
        %v717 = vpop.permute.xlu0 %716
        %718 = vrot.lane.b32.xlu0 %v445, 16
        %v719 = vpop.permute.xlu0 %718
        %720 = vrot.lane.b32.xlu0 %v448, 16
        %v721 = vpop.permute.xlu0 %720
        %722 = vrot.lane.b32.xlu0 %v451, 16
        %v723 = vpop.permute.xlu0 %722
        %724 = vrot.lane.b32.xlu0 %v454, 16
        %v725 = vpop.permute.xlu0 %724
        %726 = vrot.lane.b32.xlu0 %v457, 16
        %v727 = vpop.permute.xlu0 %726
        %728 = vrot.lane.b32.xlu0 %v460, 16
        %v729 = vpop.permute.xlu0 %728
        %730 = vrot.lane.b32.xlu0 %v463, 16
        %v731 = vpop.permute.xlu0 %730
        %732 = vrot.lane.b32.xlu0 %v466, 16
        %v733 = vpop.permute.xlu0 %732
        %734 = vrot.lane.b32.xlu0 %v469, 16
        %v735 = vpop.permute.xlu0 %734
        %736 = vrot.lane.b32.xlu0 %v472, 16
        %v737 = vpop.permute.xlu0 %736
        %738 = vrot.lane.b32.xlu0 %v475, 16
        %v739 = vpop.permute.xlu0 %738
        %740 = vrot.lane.b32.xlu0 %v478, 16
        %v741 = vpop.permute.xlu0 %740
        %742 = vrot.lane.b32.xlu0 %v481, 16
        %v743 = vpop.permute.xlu0 %742
        %744 = vrot.lane.b32.xlu0 %v484, 16
        %v745 = vpop.permute.xlu0 %744
        %746 = vrot.lane.b32.xlu0 %v487, 16
        %v747 = vpop.permute.xlu0 %746
        %748 = vrot.lane.b32.xlu0 %v490, 16
        %v749 = vpop.permute.xlu0 %748
        %750 = vrot.lane.b32.xlu0 %v493, 16
        %v751 = vpop.permute.xlu0 %750
        %752 = vrot.lane.b32.xlu0 %v496, 16
        %v753 = vpop.permute.xlu0 %752
        %786 = vrot.lane.b32.xlu0 %v500, 32
        %v787 = vpop.permute.xlu0 %786
        %788 = vrot.lane.b32.xlu0 %v503, 32
        %v789 = vpop.permute.xlu0 %788
        %790 = vrot.lane.b32.xlu0 %v506, 32
        %v791 = vpop.permute.xlu0 %790
        %792 = vrot.lane.b32.xlu0 %v509, 32
        %v793 = vpop.permute.xlu0 %792
        %794 = vrot.lane.b32.xlu0 %v512, 32
        %v795 = vpop.permute.xlu0 %794
        %796 = vrot.lane.b32.xlu0 %v515, 32
        %v797 = vpop.permute.xlu0 %796
        %798 = vrot.lane.b32.xlu0 %v518, 32
        %v799 = vpop.permute.xlu0 %798
        %800 = vrot.lane.b32.xlu0 %v521, 32
        %v801 = vpop.permute.xlu0 %800
        %802 = vrot.lane.b32.xlu0 %v524, 32
        %v803 = vpop.permute.xlu0 %802
        %804 = vrot.lane.b32.xlu0 %v527, 32
        %v805 = vpop.permute.xlu0 %804
        %806 = vrot.lane.b32.xlu0 %v530, 32
        %v807 = vpop.permute.xlu0 %806
        %808 = vrot.lane.b32.xlu0 %v533, 32
        %v809 = vpop.permute.xlu0 %808
        %810 = vrot.lane.b32.xlu0 %v536, 32
        %v811 = vpop.permute.xlu0 %810
        %812 = vrot.lane.b32.xlu0 %v539, 32
        %v813 = vpop.permute.xlu0 %812
        %814 = vrot.lane.b32.xlu0 %v542, 32
        %v815 = vpop.permute.xlu0 %814
        %816 = vrot.lane.b32.xlu0 %v545, 32
        %v817 = vpop.permute.xlu0 %816
        %818 = vrot.lane.b32.xlu0 %v548, 32
        %v819 = vpop.permute.xlu0 %818
        %820 = vrot.lane.b32.xlu0 %v551, 32
        %v821 = vpop.permute.xlu0 %820
        %822 = vrot.lane.b32.xlu0 %v554, 32
        %v823 = vpop.permute.xlu0 %822
        %824 = vrot.lane.b32.xlu0 %v557, 32
        %v825 = vpop.permute.xlu0 %824
        %826 = vrot.lane.b32.xlu0 %v560, 32
        %v827 = vpop.permute.xlu0 %826
        %828 = vrot.lane.b32.xlu0 %v563, 32
        %v829 = vpop.permute.xlu0 %828
        %830 = vrot.lane.b32.xlu0 %v566, 32
        %v831 = vpop.permute.xlu0 %830
        %832 = vrot.lane.b32.xlu0 %v569, 32
        %v833 = vpop.permute.xlu0 %832
        %834 = vrot.lane.b32.xlu0 %v572, 32
        %v835 = vpop.permute.xlu0 %834
        %836 = vrot.lane.b32.xlu0 %v575, 32
        %v837 = vpop.permute.xlu0 %836
        %838 = vrot.lane.b32.xlu0 %v578, 32
        %v839 = vpop.permute.xlu0 %838
        %840 = vrot.lane.b32.xlu0 %v581, 32
        %v841 = vpop.permute.xlu0 %840
        %842 = vrot.lane.b32.xlu0 %v584, 32
        %v843 = vpop.permute.xlu0 %842
        %844 = vrot.lane.b32.xlu0 %v587, 32
        %v845 = vpop.permute.xlu0 %844
        %846 = vrot.lane.b32.xlu0 %v590, 32
        %v847 = vpop.permute.xlu0 %846
        %848 = vrot.lane.b32.xlu0 %v593, 32
        %v849 = vpop.permute.xlu0 %848
        %882 = vrot.lane.b32.xlu0 %v258, 48
        %v883 = vpop.permute.xlu0 %882
        %884 = vrot.lane.b32.xlu0 %v260, 48
        %v885 = vpop.permute.xlu0 %884
        %886 = vrot.lane.b32.xlu0 %v262, 48
        %v887 = vpop.permute.xlu0 %886
        %888 = vrot.lane.b32.xlu0 %v264, 48
        %v889 = vpop.permute.xlu0 %888
        %890 = vrot.lane.b32.xlu0 %v266, 48
        %v891 = vpop.permute.xlu0 %890
        %892 = vrot.lane.b32.xlu0 %v268, 48
        %v893 = vpop.permute.xlu0 %892
        %894 = vrot.lane.b32.xlu0 %v270, 48
        %v895 = vpop.permute.xlu0 %894
        %896 = vrot.lane.b32.xlu0 %v272, 48
        %v897 = vpop.permute.xlu0 %896
        %898 = vrot.lane.b32.xlu0 %v278, 48
        %v899 = vpop.permute.xlu0 %898
        %900 = vrot.lane.b32.xlu0 %v280, 48
        %v901 = vpop.permute.xlu0 %900
        %902 = vrot.lane.b32.xlu0 %v282, 48
        %v903 = vpop.permute.xlu0 %902
        %904 = vrot.lane.b32.xlu0 %v284, 48
        %v905 = vpop.permute.xlu0 %904
        %906 = vrot.lane.b32.xlu0 %v286, 48
        %v907 = vpop.permute.xlu0 %906
        %908 = vrot.lane.b32.xlu0 %v288, 48
        %v909 = vpop.permute.xlu0 %908
        %910 = vrot.lane.b32.xlu0 %v290, 48
        %v911 = vpop.permute.xlu0 %910
        %912 = vrot.lane.b32.xlu0 %v292, 48
        %v913 = vpop.permute.xlu0 %912
        %914 = vrot.lane.b32.xlu0 %v298, 48
        %v915 = vpop.permute.xlu0 %914
        %916 = vrot.lane.b32.xlu0 %v300, 48
        %v917 = vpop.permute.xlu0 %916
        %918 = vrot.lane.b32.xlu0 %v302, 48
        %v919 = vpop.permute.xlu0 %918
        %920 = vrot.lane.b32.xlu0 %v304, 48
        %v921 = vpop.permute.xlu0 %920
        %922 = vrot.lane.b32.xlu0 %v306, 48
        %v923 = vpop.permute.xlu0 %922
        %924 = vrot.lane.b32.xlu0 %v308, 48
        %v925 = vpop.permute.xlu0 %924
        %926 = vrot.lane.b32.xlu0 %v310, 48
        %v927 = vpop.permute.xlu0 %926
        %928 = vrot.lane.b32.xlu0 %v312, 48
        %v929 = vpop.permute.xlu0 %928
        %930 = vrot.lane.b32.xlu0 %v318, 48
        %v931 = vpop.permute.xlu0 %930
        %932 = vrot.lane.b32.xlu0 %v320, 48
        %v933 = vpop.permute.xlu0 %932
        %934 = vrot.lane.b32.xlu0 %v322, 48
        %v935 = vpop.permute.xlu0 %934
        %936 = vrot.lane.b32.xlu0 %v324, 48
        %v937 = vpop.permute.xlu0 %936
        %938 = vrot.lane.b32.xlu0 %v326, 48
        %v939 = vpop.permute.xlu0 %938
        %940 = vrot.lane.b32.xlu0 %v328, 48
        %v941 = vpop.permute.xlu0 %940
        %942 = vrot.lane.b32.xlu0 %v330, 48
        %v943 = vpop.permute.xlu0 %942
        %944 = vrot.lane.b32.xlu0 %v332, 48
        %v945 = vpop.permute.xlu0 %944
        %978 = vrot.lane.b32.xlu0 %v406, 64
        %v979 = vpop.permute.xlu0 %978
        %980 = vrot.lane.b32.xlu0 %v409, 64
        %v981 = vpop.permute.xlu0 %980
        %982 = vrot.lane.b32.xlu0 %v412, 64
        %v983 = vpop.permute.xlu0 %982
        %984 = vrot.lane.b32.xlu0 %v415, 64
        %v985 = vpop.permute.xlu0 %984
        %986 = vrot.lane.b32.xlu0 %v418, 64
        %v987 = vpop.permute.xlu0 %986
        %988 = vrot.lane.b32.xlu0 %v421, 64
        %v989 = vpop.permute.xlu0 %988
        %990 = vrot.lane.b32.xlu0 %v424, 64
        %v991 = vpop.permute.xlu0 %990
        %992 = vrot.lane.b32.xlu0 %v604, 64
        %v993 = vpop.permute.xlu0 %992
        %994 = vrot.lane.b32.xlu0 %v430, 64
        %v995 = vpop.permute.xlu0 %994
        %996 = vrot.lane.b32.xlu0 %v433, 64
        %v997 = vpop.permute.xlu0 %996
        %998 = vrot.lane.b32.xlu0 %v436, 64
        %v999 = vpop.permute.xlu0 %998
        %1000 = vrot.lane.b32.xlu0 %v439, 64
        %v1001 = vpop.permute.xlu0 %1000
        %1002 = vrot.lane.b32.xlu0 %v442, 64
        %v1003 = vpop.permute.xlu0 %1002
        %1004 = vrot.lane.b32.xlu0 %v445, 64
        %v1005 = vpop.permute.xlu0 %1004
        %1006 = vrot.lane.b32.xlu0 %v448, 64
        %v1007 = vpop.permute.xlu0 %1006
        %1008 = vrot.lane.b32.xlu0 %v607, 64
        %v1009 = vpop.permute.xlu0 %1008
        %1010 = vrot.lane.b32.xlu0 %v454, 64
        %v1011 = vpop.permute.xlu0 %1010
        %1012 = vrot.lane.b32.xlu0 %v457, 64
        %v1013 = vpop.permute.xlu0 %1012
        %1014 = vrot.lane.b32.xlu0 %v460, 64
        %v1015 = vpop.permute.xlu0 %1014
        %1016 = vrot.lane.b32.xlu0 %v463, 64
        %v1017 = vpop.permute.xlu0 %1016
        %1018 = vrot.lane.b32.xlu0 %v466, 64
        %v1019 = vpop.permute.xlu0 %1018
        %1020 = vrot.lane.b32.xlu0 %v469, 64
        %v1021 = vpop.permute.xlu0 %1020
        %1022 = vrot.lane.b32.xlu0 %v472, 64
        %v1023 = vpop.permute.xlu0 %1022
        %1024 = vrot.lane.b32.xlu0 %v610, 64
        %v1025 = vpop.permute.xlu0 %1024
        %1026 = vrot.lane.b32.xlu0 %v478, 64
        %v1027 = vpop.permute.xlu0 %1026
        %1028 = vrot.lane.b32.xlu0 %v481, 64
        %v1029 = vpop.permute.xlu0 %1028
        %1030 = vrot.lane.b32.xlu0 %v484, 64
        %v1031 = vpop.permute.xlu0 %1030
        %1032 = vrot.lane.b32.xlu0 %v487, 64
        %v1033 = vpop.permute.xlu0 %1032
        %1034 = vrot.lane.b32.xlu0 %v490, 64
        %v1035 = vpop.permute.xlu0 %1034
        %1036 = vrot.lane.b32.xlu0 %v493, 64
        %v1037 = vpop.permute.xlu0 %1036
        %1038 = vrot.lane.b32.xlu0 %v496, 64
        %v1039 = vpop.permute.xlu0 %1038
        %1040 = vrot.lane.b32.xlu0 %v613, 64
        %v1041 = vpop.permute.xlu0 %1040
        %1074 = vrot.lane.b32.xlu0 %v503, 80
        %v1075 = vpop.permute.xlu0 %1074
        %1076 = vrot.lane.b32.xlu0 %v506, 80
        %v1077 = vpop.permute.xlu0 %1076
        %1078 = vrot.lane.b32.xlu0 %v509, 80
        %v1079 = vpop.permute.xlu0 %1078
        %1080 = vrot.lane.b32.xlu0 %v512, 80
        %v1081 = vpop.permute.xlu0 %1080
        %1082 = vrot.lane.b32.xlu0 %v515, 80
        %v1083 = vpop.permute.xlu0 %1082
        %1084 = vrot.lane.b32.xlu0 %v518, 80
        %v1085 = vpop.permute.xlu0 %1084
        %1086 = vrot.lane.b32.xlu0 %v521, 80
        %v1087 = vpop.permute.xlu0 %1086
        %1088 = vrot.lane.b32.xlu0 %v616, 80
        %v1089 = vpop.permute.xlu0 %1088
        %1090 = vrot.lane.b32.xlu0 %v527, 80
        %v1091 = vpop.permute.xlu0 %1090
        %1092 = vrot.lane.b32.xlu0 %v530, 80
        %v1093 = vpop.permute.xlu0 %1092
        %1094 = vrot.lane.b32.xlu0 %v533, 80
        %v1095 = vpop.permute.xlu0 %1094
        %1096 = vrot.lane.b32.xlu0 %v536, 80
        %v1097 = vpop.permute.xlu0 %1096
        %1098 = vrot.lane.b32.xlu0 %v539, 80
        %v1099 = vpop.permute.xlu0 %1098
        %1100 = vrot.lane.b32.xlu0 %v542, 80
        %v1101 = vpop.permute.xlu0 %1100
        %1102 = vrot.lane.b32.xlu0 %v545, 80
        %v1103 = vpop.permute.xlu0 %1102
        %1104 = vrot.lane.b32.xlu0 %v619, 80
        %v1105 = vpop.permute.xlu0 %1104
        %1106 = vrot.lane.b32.xlu0 %v551, 80
        %v1107 = vpop.permute.xlu0 %1106
        %1108 = vrot.lane.b32.xlu0 %v554, 80
        %v1109 = vpop.permute.xlu0 %1108
        %1110 = vrot.lane.b32.xlu0 %v557, 80
        %v1111 = vpop.permute.xlu0 %1110
        %1112 = vrot.lane.b32.xlu0 %v560, 80
        %v1113 = vpop.permute.xlu0 %1112
        %1114 = vrot.lane.b32.xlu0 %v563, 80
        %v1115 = vpop.permute.xlu0 %1114
        %1116 = vrot.lane.b32.xlu0 %v566, 80
        %v1117 = vpop.permute.xlu0 %1116
        %1118 = vrot.lane.b32.xlu0 %v569, 80
        %v1119 = vpop.permute.xlu0 %1118
        %1120 = vrot.lane.b32.xlu0 %v622, 80
        %v1121 = vpop.permute.xlu0 %1120
        %1122 = vrot.lane.b32.xlu0 %v575, 80
        %v1123 = vpop.permute.xlu0 %1122
        %1124 = vrot.lane.b32.xlu0 %v578, 80
        %v1125 = vpop.permute.xlu0 %1124
        %1126 = vrot.lane.b32.xlu0 %v581, 80
        %v1127 = vpop.permute.xlu0 %1126
        %1128 = vrot.lane.b32.xlu0 %v584, 80
        %v1129 = vpop.permute.xlu0 %1128
        %1130 = vrot.lane.b32.xlu0 %v587, 80
        %v1131 = vpop.permute.xlu0 %1130
        %1132 = vrot.lane.b32.xlu0 %v590, 80
        %v1133 = vpop.permute.xlu0 %1132
        %1134 = vrot.lane.b32.xlu0 %v593, 80
        %v1135 = vpop.permute.xlu0 %1134
        %1136 = vrot.lane.b32.xlu0 %v625, 80
        %v1137 = vpop.permute.xlu0 %1136
        %1170 = vrot.lane.b32.xlu0 %v260, 96
        %v1171 = vpop.permute.xlu0 %1170
        %1172 = vrot.lane.b32.xlu0 %v262, 96
        %v1173 = vpop.permute.xlu0 %1172
        %1174 = vrot.lane.b32.xlu0 %v264, 96
        %v1175 = vpop.permute.xlu0 %1174
        %1176 = vrot.lane.b32.xlu0 %v266, 96
        %v1177 = vpop.permute.xlu0 %1176
        %1178 = vrot.lane.b32.xlu0 %v268, 96
        %v1179 = vpop.permute.xlu0 %1178
        %1180 = vrot.lane.b32.xlu0 %v270, 96
        %v1181 = vpop.permute.xlu0 %1180
        %1182 = vrot.lane.b32.xlu0 %v272, 96
        %v1183 = vpop.permute.xlu0 %1182
        %1184 = vrot.lane.b32.xlu0 %v274, 96
        %v1185 = vpop.permute.xlu0 %1184
        %1186 = vrot.lane.b32.xlu0 %v280, 96
        %v1187 = vpop.permute.xlu0 %1186
        %1188 = vrot.lane.b32.xlu0 %v282, 96
        %v1189 = vpop.permute.xlu0 %1188
        %1190 = vrot.lane.b32.xlu0 %v284, 96
        %v1191 = vpop.permute.xlu0 %1190
        %1192 = vrot.lane.b32.xlu0 %v286, 96
        %v1193 = vpop.permute.xlu0 %1192
        %1194 = vrot.lane.b32.xlu0 %v288, 96
        %v1195 = vpop.permute.xlu0 %1194
        %1196 = vrot.lane.b32.xlu0 %v290, 96
        %v1197 = vpop.permute.xlu0 %1196
        %1198 = vrot.lane.b32.xlu0 %v292, 96
        %v1199 = vpop.permute.xlu0 %1198
        %1200 = vrot.lane.b32.xlu0 %v294, 96
        %v1201 = vpop.permute.xlu0 %1200
        %1202 = vrot.lane.b32.xlu0 %v300, 96
        %v1203 = vpop.permute.xlu0 %1202
        %1204 = vrot.lane.b32.xlu0 %v302, 96
        %v1205 = vpop.permute.xlu0 %1204
        %1206 = vrot.lane.b32.xlu0 %v304, 96
        %v1207 = vpop.permute.xlu0 %1206
        %1208 = vrot.lane.b32.xlu0 %v306, 96
        %v1209 = vpop.permute.xlu0 %1208
        %1210 = vrot.lane.b32.xlu0 %v308, 96
        %v1211 = vpop.permute.xlu0 %1210
        %1212 = vrot.lane.b32.xlu0 %v310, 96
        %v1213 = vpop.permute.xlu0 %1212
        %1214 = vrot.lane.b32.xlu0 %v312, 96
        %v1215 = vpop.permute.xlu0 %1214
        %1216 = vrot.lane.b32.xlu0 %v314, 96
        %v1217 = vpop.permute.xlu0 %1216
        %1218 = vrot.lane.b32.xlu0 %v320, 96
        %v1219 = vpop.permute.xlu0 %1218
        %1220 = vrot.lane.b32.xlu0 %v322, 96
        %v1221 = vpop.permute.xlu0 %1220
        %1222 = vrot.lane.b32.xlu0 %v324, 96
        %v1223 = vpop.permute.xlu0 %1222
        %1224 = vrot.lane.b32.xlu0 %v326, 96
        %v1225 = vpop.permute.xlu0 %1224
        %1226 = vrot.lane.b32.xlu0 %v328, 96
        %v1227 = vpop.permute.xlu0 %1226
        %1228 = vrot.lane.b32.xlu0 %v330, 96
        %v1229 = vpop.permute.xlu0 %1228
        %1230 = vrot.lane.b32.xlu0 %v332, 96
        %v1231 = vpop.permute.xlu0 %1230
        %1232 = vrot.lane.b32.xlu0 %v334, 96
        %v1233 = vpop.permute.xlu0 %1232
        %1266 = vrot.lane.b32.xlu0 %v409, 112
        %v1267 = vpop.permute.xlu0 %1266
        %1268 = vrot.lane.b32.xlu0 %v412, 112
        %v1269 = vpop.permute.xlu0 %1268
        %1270 = vrot.lane.b32.xlu0 %v415, 112
        %v1271 = vpop.permute.xlu0 %1270
        %1272 = vrot.lane.b32.xlu0 %v418, 112
        %v1273 = vpop.permute.xlu0 %1272
        %1274 = vrot.lane.b32.xlu0 %v421, 112
        %v1275 = vpop.permute.xlu0 %1274
        %1276 = vrot.lane.b32.xlu0 %v424, 112
        %v1277 = vpop.permute.xlu0 %1276
        %1278 = vrot.lane.b32.xlu0 %v604, 112
        %v1279 = vpop.permute.xlu0 %1278
        %1280 = vrot.lane.b32.xlu0 %v636, 112
        %v1281 = vpop.permute.xlu0 %1280
        %1282 = vrot.lane.b32.xlu0 %v433, 112
        %v1283 = vpop.permute.xlu0 %1282
        %1284 = vrot.lane.b32.xlu0 %v436, 112
        %v1285 = vpop.permute.xlu0 %1284
        %1286 = vrot.lane.b32.xlu0 %v439, 112
        %v1287 = vpop.permute.xlu0 %1286
        %1288 = vrot.lane.b32.xlu0 %v442, 112
        %v1289 = vpop.permute.xlu0 %1288
        %1290 = vrot.lane.b32.xlu0 %v445, 112
        %v1291 = vpop.permute.xlu0 %1290
        %1292 = vrot.lane.b32.xlu0 %v448, 112
        %v1293 = vpop.permute.xlu0 %1292
        %1294 = vrot.lane.b32.xlu0 %v607, 112
        %v1295 = vpop.permute.xlu0 %1294
        %1296 = vrot.lane.b32.xlu0 %v639, 112
        %v1297 = vpop.permute.xlu0 %1296
        %1298 = vrot.lane.b32.xlu0 %v457, 112
        %v1299 = vpop.permute.xlu0 %1298
        %1300 = vrot.lane.b32.xlu0 %v460, 112
        %v1301 = vpop.permute.xlu0 %1300
        %1302 = vrot.lane.b32.xlu0 %v463, 112
        %v1303 = vpop.permute.xlu0 %1302
        %1304 = vrot.lane.b32.xlu0 %v466, 112
        %v1305 = vpop.permute.xlu0 %1304
        %1306 = vrot.lane.b32.xlu0 %v469, 112
        %v1307 = vpop.permute.xlu0 %1306
        %1308 = vrot.lane.b32.xlu0 %v472, 112
        %v1309 = vpop.permute.xlu0 %1308
        %1310 = vrot.lane.b32.xlu0 %v610, 112
        %v1311 = vpop.permute.xlu0 %1310
        %1312 = vrot.lane.b32.xlu0 %v642, 112
        %v1313 = vpop.permute.xlu0 %1312
        %1314 = vrot.lane.b32.xlu0 %v481, 112
        %v1315 = vpop.permute.xlu0 %1314
        %1316 = vrot.lane.b32.xlu0 %v484, 112
        %v1317 = vpop.permute.xlu0 %1316
        %1318 = vrot.lane.b32.xlu0 %v487, 112
        %v1319 = vpop.permute.xlu0 %1318
        %1320 = vrot.lane.b32.xlu0 %v490, 112
        %v1321 = vpop.permute.xlu0 %1320
        %1322 = vrot.lane.b32.xlu0 %v493, 112
        %v1323 = vpop.permute.xlu0 %1322
        %1324 = vrot.lane.b32.xlu0 %v496, 112
        %v1325 = vpop.permute.xlu0 %1324
        %1326 = vrot.lane.b32.xlu0 %v613, 112
        %v1327 = vpop.permute.xlu0 %1326
        %1328 = vrot.lane.b32.xlu0 %v645, 112
        %v1329 = vpop.permute.xlu0 %1328
        %vm1362 = vcmask 130048
        %v1363 = vsel %vm1362, %v256, %v691
        %v1364 = vsel %vm1362, %v258, %v693
        %v1365 = vsel %vm1362, %v260, %v695
        %v1366 = vsel %vm1362, %v262, %v697
        %v1367 = vsel %vm1362, %v264, %v699
        %v1368 = vsel %vm1362, %v266, %v701
        %v1369 = vsel %vm1362, %v268, %v703
        %v1370 = vsel %vm1362, %v270, %v705
        %v1371 = vsel %vm1362, %v276, %v707
        %v1372 = vsel %vm1362, %v278, %v709
        %v1373 = vsel %vm1362, %v280, %v711
        %v1374 = vsel %vm1362, %v282, %v713
        %v1375 = vsel %vm1362, %v284, %v715
        %v1376 = vsel %vm1362, %v286, %v717
        %v1377 = vsel %vm1362, %v288, %v719
        %v1378 = vsel %vm1362, %v290, %v721
        %v1379 = vsel %vm1362, %v296, %v723
        %v1380 = vsel %vm1362, %v298, %v725
        %v1381 = vsel %vm1362, %v300, %v727
        %v1382 = vsel %vm1362, %v302, %v729
        %v1383 = vsel %vm1362, %v304, %v731
        %v1384 = vsel %vm1362, %v306, %v733
        %v1385 = vsel %vm1362, %v308, %v735
        %v1386 = vsel %vm1362, %v310, %v737
        %v1387 = vsel %vm1362, %v316, %v739
        %v1388 = vsel %vm1362, %v318, %v741
        %v1389 = vsel %vm1362, %v320, %v743
        %v1390 = vsel %vm1362, %v322, %v745
        %v1391 = vsel %vm1362, %v324, %v747
        %v1392 = vsel %vm1362, %v326, %v749
        %v1393 = vsel %vm1362, %v328, %v751
        %v1394 = vsel %vm1362, %v330, %v753
        %vm1395 = vcmask 261120
        %v1396 = vsel %vm1395, %v1363, %v787
        %v1397 = vsel %vm1395, %v1364, %v789
        %v1398 = vsel %vm1395, %v1365, %v791
        %v1399 = vsel %vm1395, %v1366, %v793
        %v1400 = vsel %vm1395, %v1367, %v795
        %v1401 = vsel %vm1395, %v1368, %v797
        %v1402 = vsel %vm1395, %v1369, %v799
        %v1403 = vsel %vm1395, %v1370, %v801
        %v1404 = vsel %vm1395, %v1371, %v803
        %v1405 = vsel %vm1395, %v1372, %v805
        %v1406 = vsel %vm1395, %v1373, %v807
        %v1407 = vsel %vm1395, %v1374, %v809
        %v1408 = vsel %vm1395, %v1375, %v811
        %v1409 = vsel %vm1395, %v1376, %v813
        %v1410 = vsel %vm1395, %v1377, %v815
        %v1411 = vsel %vm1395, %v1378, %v817
        %v1412 = vsel %vm1395, %v1379, %v819
        %v1413 = vsel %vm1395, %v1380, %v821
        %v1414 = vsel %vm1395, %v1381, %v823
        %v1415 = vsel %vm1395, %v1382, %v825
        %v1416 = vsel %vm1395, %v1383, %v827
        %v1417 = vsel %vm1395, %v1384, %v829
        %v1418 = vsel %vm1395, %v1385, %v831
        %v1419 = vsel %vm1395, %v1386, %v833
        %v1420 = vsel %vm1395, %v1387, %v835
        %v1421 = vsel %vm1395, %v1388, %v837
        %v1422 = vsel %vm1395, %v1389, %v839
        %v1423 = vsel %vm1395, %v1390, %v841
        %v1424 = vsel %vm1395, %v1391, %v843
        %v1425 = vsel %vm1395, %v1392, %v845
        %v1426 = vsel %vm1395, %v1393, %v847
        %v1427 = vsel %vm1395, %v1394, %v849
        %vm1428 = vcmask 392192
        %v1429 = vsel %vm1428, %v1396, %v883
        %v1430 = vsel %vm1428, %v1397, %v885
        %v1431 = vsel %vm1428, %v1398, %v887
        %v1432 = vsel %vm1428, %v1399, %v889
        %v1433 = vsel %vm1428, %v1400, %v891
        %v1434 = vsel %vm1428, %v1401, %v893
        %v1435 = vsel %vm1428, %v1402, %v895
        %v1436 = vsel %vm1428, %v1403, %v897
        %v1437 = vsel %vm1428, %v1404, %v899
        %v1438 = vsel %vm1428, %v1405, %v901
        %v1439 = vsel %vm1428, %v1406, %v903
        %v1440 = vsel %vm1428, %v1407, %v905
        %v1441 = vsel %vm1428, %v1408, %v907
        %v1442 = vsel %vm1428, %v1409, %v909
        %v1443 = vsel %vm1428, %v1410, %v911
        %v1444 = vsel %vm1428, %v1411, %v913
        %v1445 = vsel %vm1428, %v1412, %v915
        %v1446 = vsel %vm1428, %v1413, %v917
        %v1447 = vsel %vm1428, %v1414, %v919
        %v1448 = vsel %vm1428, %v1415, %v921
        %v1449 = vsel %vm1428, %v1416, %v923
        %v1450 = vsel %vm1428, %v1417, %v925
        %v1451 = vsel %vm1428, %v1418, %v927
        %v1452 = vsel %vm1428, %v1419, %v929
        %v1453 = vsel %vm1428, %v1420, %v931
        %v1454 = vsel %vm1428, %v1421, %v933
        %v1455 = vsel %vm1428, %v1422, %v935
        %v1456 = vsel %vm1428, %v1423, %v937
        %v1457 = vsel %vm1428, %v1424, %v939
        %v1458 = vsel %vm1428, %v1425, %v941
        %v1459 = vsel %vm1428, %v1426, %v943
        %v1460 = vsel %vm1428, %v1427, %v945
        %vm1461 = vcmask 523264
        %v1462 = vsel %vm1461, %v1429, %v979
        %v1463 = vsel %vm1461, %v1430, %v981
        %v1464 = vsel %vm1461, %v1431, %v983
        %v1465 = vsel %vm1461, %v1432, %v985
        %v1466 = vsel %vm1461, %v1433, %v987
        %v1467 = vsel %vm1461, %v1434, %v989
        %v1468 = vsel %vm1461, %v1435, %v991
        %v1469 = vsel %vm1461, %v1436, %v993
        %v1470 = vsel %vm1461, %v1437, %v995
        %v1471 = vsel %vm1461, %v1438, %v997
        %v1472 = vsel %vm1461, %v1439, %v999
        %v1473 = vsel %vm1461, %v1440, %v1001
        %v1474 = vsel %vm1461, %v1441, %v1003
        %v1475 = vsel %vm1461, %v1442, %v1005
        %v1476 = vsel %vm1461, %v1443, %v1007
        %v1477 = vsel %vm1461, %v1444, %v1009
        %v1478 = vsel %vm1461, %v1445, %v1011
        %v1479 = vsel %vm1461, %v1446, %v1013
        %v1480 = vsel %vm1461, %v1447, %v1015
        %v1481 = vsel %vm1461, %v1448, %v1017
        %v1482 = vsel %vm1461, %v1449, %v1019
        %v1483 = vsel %vm1461, %v1450, %v1021
        %v1484 = vsel %vm1461, %v1451, %v1023
        %v1485 = vsel %vm1461, %v1452, %v1025
        %v1486 = vsel %vm1461, %v1453, %v1027
        %v1487 = vsel %vm1461, %v1454, %v1029
        %v1488 = vsel %vm1461, %v1455, %v1031
        %v1489 = vsel %vm1461, %v1456, %v1033
        %v1490 = vsel %vm1461, %v1457, %v1035
        %v1491 = vsel %vm1461, %v1458, %v1037
        %v1492 = vsel %vm1461, %v1459, %v1039
        %v1493 = vsel %vm1461, %v1460, %v1041
        %vm1494 = vcmask 654336
        %v1495 = vsel %vm1494, %v1462, %v1075
        %v1496 = vsel %vm1494, %v1463, %v1077
        %v1497 = vsel %vm1494, %v1464, %v1079
        %v1498 = vsel %vm1494, %v1465, %v1081
        %v1499 = vsel %vm1494, %v1466, %v1083
        %v1500 = vsel %vm1494, %v1467, %v1085
        %v1501 = vsel %vm1494, %v1468, %v1087
        %v1502 = vsel %vm1494, %v1469, %v1089
        %v1503 = vsel %vm1494, %v1470, %v1091
        %v1504 = vsel %vm1494, %v1471, %v1093
        %v1505 = vsel %vm1494, %v1472, %v1095
        %v1506 = vsel %vm1494, %v1473, %v1097
        %v1507 = vsel %vm1494, %v1474, %v1099
        %v1508 = vsel %vm1494, %v1475, %v1101
        %v1509 = vsel %vm1494, %v1476, %v1103
        %v1510 = vsel %vm1494, %v1477, %v1105
        %v1511 = vsel %vm1494, %v1478, %v1107
        %v1512 = vsel %vm1494, %v1479, %v1109
        %v1513 = vsel %vm1494, %v1480, %v1111
        %v1514 = vsel %vm1494, %v1481, %v1113
        %v1515 = vsel %vm1494, %v1482, %v1115
        %v1516 = vsel %vm1494, %v1483, %v1117
        %v1517 = vsel %vm1494, %v1484, %v1119
        %v1518 = vsel %vm1494, %v1485, %v1121
        %v1519 = vsel %vm1494, %v1486, %v1123
        %v1520 = vsel %vm1494, %v1487, %v1125
        %v1521 = vsel %vm1494, %v1488, %v1127
        %v1522 = vsel %vm1494, %v1489, %v1129
        %v1523 = vsel %vm1494, %v1490, %v1131
        %v1524 = vsel %vm1494, %v1491, %v1133
        %v1525 = vsel %vm1494, %v1492, %v1135
        %v1526 = vsel %vm1494, %v1493, %v1137
        %vm1527 = vcmask 785408
        %v1528 = vsel %vm1527, %v1495, %v1171
        %v1529 = vsel %vm1527, %v1496, %v1173
        %v1530 = vsel %vm1527, %v1497, %v1175
        %v1531 = vsel %vm1527, %v1498, %v1177
        %v1532 = vsel %vm1527, %v1499, %v1179
        %v1533 = vsel %vm1527, %v1500, %v1181
        %v1534 = vsel %vm1527, %v1501, %v1183
        %v1535 = vsel %vm1527, %v1502, %v1185
        %v1536 = vsel %vm1527, %v1503, %v1187
        %v1537 = vsel %vm1527, %v1504, %v1189
        %v1538 = vsel %vm1527, %v1505, %v1191
        %v1539 = vsel %vm1527, %v1506, %v1193
        %v1540 = vsel %vm1527, %v1507, %v1195
        %v1541 = vsel %vm1527, %v1508, %v1197
        %v1542 = vsel %vm1527, %v1509, %v1199
        %v1543 = vsel %vm1527, %v1510, %v1201
        %v1544 = vsel %vm1527, %v1511, %v1203
        %v1545 = vsel %vm1527, %v1512, %v1205
        %v1546 = vsel %vm1527, %v1513, %v1207
        %v1547 = vsel %vm1527, %v1514, %v1209
        %v1548 = vsel %vm1527, %v1515, %v1211
        %v1549 = vsel %vm1527, %v1516, %v1213
        %v1550 = vsel %vm1527, %v1517, %v1215
        %v1551 = vsel %vm1527, %v1518, %v1217
        %v1552 = vsel %vm1527, %v1519, %v1219
        %v1553 = vsel %vm1527, %v1520, %v1221
        %v1554 = vsel %vm1527, %v1521, %v1223
        %v1555 = vsel %vm1527, %v1522, %v1225
        %v1556 = vsel %vm1527, %v1523, %v1227
        %v1557 = vsel %vm1527, %v1524, %v1229
        %v1558 = vsel %vm1527, %v1525, %v1231
        %v1559 = vsel %vm1527, %v1526, %v1233
        %vm1560 = vcmask 916480
        %v1561 = vsel %vm1560, %v1528, %v1267
        %v1562 = vsel %vm1560, %v1529, %v1269
        %v1563 = vsel %vm1560, %v1530, %v1271
        %v1564 = vsel %vm1560, %v1531, %v1273
        %v1565 = vsel %vm1560, %v1532, %v1275
        %v1566 = vsel %vm1560, %v1533, %v1277
        %v1567 = vsel %vm1560, %v1534, %v1279
        %v1568 = vsel %vm1560, %v1535, %v1281
        %v1569 = vsel %vm1560, %v1536, %v1283
        %v1570 = vsel %vm1560, %v1537, %v1285
        %v1571 = vsel %vm1560, %v1538, %v1287
        %v1572 = vsel %vm1560, %v1539, %v1289
        %v1573 = vsel %vm1560, %v1540, %v1291
        %v1574 = vsel %vm1560, %v1541, %v1293
        %v1575 = vsel %vm1560, %v1542, %v1295
        %v1576 = vsel %vm1560, %v1543, %v1297
        %v1577 = vsel %vm1560, %v1544, %v1299
        %v1578 = vsel %vm1560, %v1545, %v1301
        %v1579 = vsel %vm1560, %v1546, %v1303
        %v1580 = vsel %vm1560, %v1547, %v1305
        %v1581 = vsel %vm1560, %v1548, %v1307
        %v1582 = vsel %vm1560, %v1549, %v1309
        %v1583 = vsel %vm1560, %v1550, %v1311
        %v1584 = vsel %vm1560, %v1551, %v1313
        %v1585 = vsel %vm1560, %v1552, %v1315
        %v1586 = vsel %vm1560, %v1553, %v1317
        %v1587 = vsel %vm1560, %v1554, %v1319
        %v1588 = vsel %vm1560, %v1555, %v1321
        %v1589 = vsel %vm1560, %v1556, %v1323
        %v1590 = vsel %vm1560, %v1557, %v1325
        %v1591 = vsel %vm1560, %v1558, %v1327
        %v1592 = vsel %vm1560, %v1559, %v1329
        %v1593 = vpack.c.bf16 %v1562, %v1561
        %v1594 = vpack.c.bf16 %v509, %v506
        %v1595 = vpack.c.bf16 %v1564, %v1563
        %v1596 = vpack.c.bf16 %v515, %v512
        %v1597 = vpack.c.bf16 %v1566, %v1565
        %v1598 = vpack.c.bf16 %v521, %v518
        %v1599 = vpack.c.bf16 %v1568, %v1567
        %v1600 = vpack.c.bf16 %v648, %v616
        %v1601 = vpack.c.bf16 %v1570, %v1569
        %v1602 = vpack.c.bf16 %v533, %v530
        %v1603 = vpack.c.bf16 %v1572, %v1571
        %v1604 = vpack.c.bf16 %v539, %v536
        %v1605 = vpack.c.bf16 %v1574, %v1573
        %v1606 = vpack.c.bf16 %v545, %v542
        %v1607 = vpack.c.bf16 %v1576, %v1575
        %v1608 = vpack.c.bf16 %v651, %v619
        %v1609 = vpack.c.bf16 %v1578, %v1577
        %v1610 = vpack.c.bf16 %v557, %v554
        %v1611 = vpack.c.bf16 %v1580, %v1579
        %v1612 = vpack.c.bf16 %v563, %v560
        %v1613 = vpack.c.bf16 %v1582, %v1581
        %v1614 = vpack.c.bf16 %v569, %v566
        %v1615 = vpack.c.bf16 %v1584, %v1583
        %v1616 = vpack.c.bf16 %v654, %v622
        %v1617 = vpack.c.bf16 %v1586, %v1585
        %v1618 = vpack.c.bf16 %v581, %v578
        %v1619 = vpack.c.bf16 %v1588, %v1587
        %v1620 = vpack.c.bf16 %v587, %v584
        %v1621 = vpack.c.bf16 %v1590, %v1589
        %v1622 = vpack.c.bf16 %v593, %v590
        %v1623 = vpack.c.bf16 %v1592, %v1591
        %v1624 = vpack.c.bf16 %v657, %v625
        %v1625 = vld [vmem:[%s1] sm:$0xf]
        %v1626 = vld [vmem:[%s1 + $0x4] sm:$0xf]
        %v1627 = vld [vmem:[%s1 + $0x8] sm:$0xf]
        %v1628 = vld [vmem:[%s1 + $0xc] sm:$0xf]
        %v1629 = vld [vmem:[%s1 + $0x10] sm:$0xf]
        %v1630 = vld [vmem:[%s1 + $0x14] sm:$0xf]
        %v1631 = vld [vmem:[%s1 + $0x18] sm:$0xf]
        %v1632 = vld [vmem:[%s1 + $0x1c] sm:$0xf]
        %v1633 = vld [vmem:[%s1 + $0x20] sm:$0xf]
        %v1634 = vld [vmem:[%s1 + $0x24] sm:$0xf]
        %v1635 = vld [vmem:[%s1 + $0x28] sm:$0xf]
        %v1636 = vld [vmem:[%s1 + $0x2c] sm:$0xf]
        %v1637 = vld [vmem:[%s1 + $0x30] sm:$0xf]
        %v1638 = vld [vmem:[%s1 + $0x34] sm:$0xf]
        %v1639 = vld [vmem:[%s1 + $0x38] sm:$0xf]
        %v1640 = vld [vmem:[%s1 + $0x3c] sm:$0xf]
        %v1641 = vld [vmem:[%s1 + $0x40] sm:$0xf]
        %v1642 = vld [vmem:[%s1 + $0x44] sm:$0xf]
        %v1643 = vld [vmem:[%s2] sm:$0x1]
        %v1645 = vlaneseq
        %v1646 = vshrl.u32 %v1645, 7
        %v1647 = vsub.s32 0, %v1646
        %v1648 = vrot.slane %v1643, %v1647
        %v1668 = vunpack.c.l.b16 %v1625
        %v1669 = vunpack.c.l.b16 %v1626
        %v1670 = vunpack.c.l.b16 %v1627
        %v1671 = vunpack.c.l.b16 %v1628
        %v1672 = vunpack.c.l.b16 %v1629
        %v1673 = vunpack.c.l.b16 %v1630
        %v1674 = vunpack.c.l.b16 %v1631
        %v1675 = vunpack.c.l.b16 %v1632
        %v1676 = vunpack.c.l.b16 %v1633
        %v1677 = vunpack.c.l.b16 %v1634
        %v1678 = vunpack.c.l.b16 %v1635
        %v1679 = vunpack.c.l.b16 %v1636
        %v1680 = vunpack.c.l.b16 %v1637
        %v1681 = vunpack.c.l.b16 %v1638
        %v1682 = vunpack.c.l.b16 %v1639
        %v1683 = vunpack.c.l.b16 %v1640
        %v1684 = vunpack.c.l.b16 %v1641
        %v1685 = vunpack.c.l.b16 %v1642
        %v1686 = vpack.c.b16 %v1669, %v1668
        %v1687 = vpack.c.b16 %v1671, %v1670
        %v1688 = vpack.c.b16 %v1673, %v1672
        %v1689 = vpack.c.b16 %v1675, %v1674
        %v1690 = vpack.c.b16 %v1677, %v1676
        %v1691 = vpack.c.b16 %v1679, %v1678
        %v1692 = vpack.c.b16 %v1681, %v1680
        %v1693 = vpack.c.b16 %v1683, %v1682
        %v1694 = vpack.c.b16 %v1685, %v1684
        %v1705 = vsel %vm1362, %v1594, 0
        %v1708 = vsel %vm1362, %v1596, 0
        %v1711 = vsel %vm1362, %v1598, 0
        %v1714 = vsel %vm1362, %v1600, 0
        %v1717 = vsel %vm1362, %v1602, 0
        %v1720 = vsel %vm1362, %v1604, 0
        %v1723 = vsel %vm1362, %v1606, 0
        %v1726 = vsel %vm1362, %v1608, 0
        %v1729 = vsel %vm1362, %v1610, 0
        %v1732 = vsel %vm1362, %v1612, 0
        %v1735 = vsel %vm1362, %v1614, 0
        %v1738 = vsel %vm1362, %v1616, 0
        %v1741 = vsel %vm1362, %v1618, 0
        %v1744 = vsel %vm1362, %v1620, 0
        %v1747 = vsel %vm1362, %v1622, 0
        %v1750 = vsel %vm1362, %v1624, 0
        %1752 = vmatprep.subr.bf16.mxu0 0
        %1753 = vmatpush1.bf16.msra.mxu0 %v1686
        %1754 = vmatprep.subr.bf16.mxu0 0
        %1755 = vmatpush1.bf16.msra.mxu0 %v1687
        %1756 = vmatprep.subr.bf16.mxu0 0
        %1757 = vmatpush1.bf16.msra.mxu0 %v1688
        %1758 = vmatprep.subr.bf16.mxu0 0
        %1759 = vmatpush1.bf16.msra.mxu0 %v1689
        %1760 = vmatprep.subr.bf16.mxu0 0
        %1761 = vmatpush1.bf16.msra.mxu0 %v1690
        %1762 = vmatprep.subr.bf16.mxu0 0
        %1763 = vmatpush1.bf16.msra.mxu0 %v1691
        %1764 = vmatprep.subr.bf16.mxu0 0
        %1765 = vmatpush1.bf16.msra.mxu0 %v1692
        %1766 = vmatprep.subr.bf16.mxu0 0
        %1767 = vmatpush1.bf16.msra.mxu0 %v1693
        %1768 = vmatprep.subr.bf16.mxu0 0
        %1769 = vmatpush1.bf16.msra.mxu0 %v1694
        %1770 = vmatprep.subr.bf16.mxu0 0
        %1771 = vmatpush1.bf16.msra.mxu0 0
        %1772 = vmatprep.subr.bf16.mxu0 0
        %1773 = vmatpush1.bf16.msra.mxu0 0
        %1774 = vmatprep.subr.bf16.mxu0 0
        %1775 = vmatpush1.bf16.msra.mxu0 0
        %1776 = vmatprep.subr.bf16.mxu0 0
        %1777 = vmatpush1.bf16.msra.mxu0 0
        %1778 = vmatprep.subr.bf16.mxu0 0
        %1779 = vmatpush1.bf16.msra.mxu0 0
        %1780 = vmatprep.subr.bf16.mxu0 0
        %1781 = vmatpush1.bf16.msra.mxu0 0
        %1782 = vmatprep.subr.bf16.mxu0 0
        %1783 = vmatpush1.bf16.msra.mxu0 0
        %1784 = vmatprep.mubr.bf16.mxu0 %v1705
        %1785 = vmatmul.mubr.bf16.gmra.mrb[0].mxu0 %v1593
        %v1786 = vpop.f32.mrb[0].mxu0
        %v1787 = vadd.f32 %v1648, %v1786
        %v1788 = vpop.f32.mrb[0].mxu0
        %v1789 = vpop.f32.mrb[0].mxu0
        %v1790 = vadd.f32 %v1648, %v1789
        %v1791 = vpop.f32.mrb[0].mxu0
        %1792 = vmatprep.mubr.bf16.mxu0 %v1708
        %1793 = vmatmul.mubr.bf16.gmra.mrb[0].mxu0 %v1595
        %v1794 = vpop.f32.mrb[0].mxu0
        %v1795 = vadd.f32 %v1648, %v1794
        %v1796 = vpop.f32.mrb[0].mxu0
        %v1797 = vpop.f32.mrb[0].mxu0
        %v1798 = vadd.f32 %v1648, %v1797
        %v1799 = vpop.f32.mrb[0].mxu0
        %1800 = vmatprep.mubr.bf16.mxu0 %v1711
        %1801 = vmatmul.mubr.bf16.gmra.mrb[0].mxu0 %v1597
        %v1802 = vpop.f32.mrb[0].mxu0
        %v1803 = vadd.f32 %v1648, %v1802
        %v1804 = vpop.f32.mrb[0].mxu0
        %v1805 = vpop.f32.mrb[0].mxu0
        %v1806 = vadd.f32 %v1648, %v1805
        %v1807 = vpop.f32.mrb[0].mxu0
        %1808 = vmatprep.mubr.bf16.mxu0 %v1714
        %1809 = vmatmul.mubr.bf16.gmra.mrb[0].mxu0 %v1599
        %v1810 = vpop.f32.mrb[0].mxu0
        %v1811 = vadd.f32 %v1648, %v1810
        %v1812 = vpop.f32.mrb[0].mxu0
        %v1813 = vpop.f32.mrb[0].mxu0
        %v1814 = vadd.f32 %v1648, %v1813
        %v1815 = vpop.f32.mrb[0].mxu0
        %1816 = vmatprep.mubr.bf16.mxu0 %v1717
        %1817 = vmatmul.mubr.bf16.gmra.mrb[0].mxu0 %v1601
        %v1818 = vpop.f32.mrb[0].mxu0
        %v1819 = vadd.f32 %v1648, %v1818
        %v1820 = vpop.f32.mrb[0].mxu0
        %v1821 = vpop.f32.mrb[0].mxu0
        %v1822 = vadd.f32 %v1648, %v1821
        %v1823 = vpop.f32.mrb[0].mxu0
        %1824 = vmatprep.mubr.bf16.mxu0 %v1720
        %1825 = vmatmul.mubr.bf16.gmra.mrb[0].mxu0 %v1603
        %v1826 = vpop.f32.mrb[0].mxu0
        %v1827 = vadd.f32 %v1648, %v1826
        %v1828 = vpop.f32.mrb[0].mxu0
        %v1829 = vpop.f32.mrb[0].mxu0
        %v1830 = vadd.f32 %v1648, %v1829
        %v1831 = vpop.f32.mrb[0].mxu0
        %1832 = vmatprep.mubr.bf16.mxu0 %v1723
        %1833 = vmatmul.mubr.bf16.gmra.mrb[0].mxu0 %v1605
        %v1834 = vpop.f32.mrb[0].mxu0
        %v1835 = vadd.f32 %v1648, %v1834
        %v1836 = vpop.f32.mrb[0].mxu0
        %v1837 = vpop.f32.mrb[0].mxu0
        %v1838 = vadd.f32 %v1648, %v1837
        %v1839 = vpop.f32.mrb[0].mxu0
        %1840 = vmatprep.mubr.bf16.mxu0 %v1726
        %1841 = vmatmul.mubr.bf16.gmra.mrb[0].mxu0 %v1607
        %v1842 = vpop.f32.mrb[0].mxu0
        %v1843 = vadd.f32 %v1648, %v1842
        %v1844 = vpop.f32.mrb[0].mxu0
        %v1845 = vpop.f32.mrb[0].mxu0
        %v1846 = vadd.f32 %v1648, %v1845
        %v1847 = vpop.f32.mrb[0].mxu0
        %1848 = vmatprep.mubr.bf16.mxu0 %v1729
        %1849 = vmatmul.mubr.bf16.gmra.mrb[0].mxu0 %v1609
        %v1850 = vpop.f32.mrb[0].mxu0
        %v1851 = vadd.f32 %v1648, %v1850
        %v1852 = vpop.f32.mrb[0].mxu0
        %v1853 = vpop.f32.mrb[0].mxu0
        %v1854 = vadd.f32 %v1648, %v1853
        %v1855 = vpop.f32.mrb[0].mxu0
        %1856 = vmatprep.mubr.bf16.mxu0 %v1732
        %1857 = vmatmul.mubr.bf16.gmra.mrb[0].mxu0 %v1611
        %v1858 = vpop.f32.mrb[0].mxu0
        %v1859 = vadd.f32 %v1648, %v1858
        %v1860 = vpop.f32.mrb[0].mxu0
        %v1861 = vpop.f32.mrb[0].mxu0
        %v1862 = vadd.f32 %v1648, %v1861
        %v1863 = vpop.f32.mrb[0].mxu0
        %1864 = vmatprep.mubr.bf16.mxu0 %v1735
        %1865 = vmatmul.mubr.bf16.gmra.mrb[0].mxu0 %v1613
        %v1866 = vpop.f32.mrb[0].mxu0
        %v1867 = vadd.f32 %v1648, %v1866
        %v1868 = vpop.f32.mrb[0].mxu0
        %v1869 = vpop.f32.mrb[0].mxu0
        %v1870 = vadd.f32 %v1648, %v1869
        %v1871 = vpop.f32.mrb[0].mxu0
        %1872 = vmatprep.mubr.bf16.mxu0 %v1738
        %1873 = vmatmul.mubr.bf16.gmra.mrb[0].mxu0 %v1615
        %v1874 = vpop.f32.mrb[0].mxu0
        %v1875 = vadd.f32 %v1648, %v1874
        %v1876 = vpop.f32.mrb[0].mxu0
        %v1877 = vpop.f32.mrb[0].mxu0
        %v1878 = vadd.f32 %v1648, %v1877
        %v1879 = vpop.f32.mrb[0].mxu0
        %1880 = vmatprep.mubr.bf16.mxu0 %v1741
        %1881 = vmatmul.mubr.bf16.gmra.mrb[0].mxu0 %v1617
        %v1882 = vpop.f32.mrb[0].mxu0
        %v1883 = vadd.f32 %v1648, %v1882
        %v1884 = vpop.f32.mrb[0].mxu0
        %v1885 = vpop.f32.mrb[0].mxu0
        %v1886 = vadd.f32 %v1648, %v1885
        %v1887 = vpop.f32.mrb[0].mxu0
        %1888 = vmatprep.mubr.bf16.mxu0 %v1744
        %1889 = vmatmul.mubr.bf16.gmra.mrb[0].mxu0 %v1619
        %v1890 = vpop.f32.mrb[0].mxu0
        %v1891 = vadd.f32 %v1648, %v1890
        %v1892 = vpop.f32.mrb[0].mxu0
        %v1893 = vpop.f32.mrb[0].mxu0
        %v1894 = vadd.f32 %v1648, %v1893
        %v1895 = vpop.f32.mrb[0].mxu0
        %1896 = vmatprep.mubr.bf16.mxu0 %v1747
        %1897 = vmatmul.mubr.bf16.gmra.mrb[0].mxu0 %v1621
        %v1898 = vpop.f32.mrb[0].mxu0
        %v1899 = vadd.f32 %v1648, %v1898
        %v1900 = vpop.f32.mrb[0].mxu0
        %v1901 = vpop.f32.mrb[0].mxu0
        %v1902 = vadd.f32 %v1648, %v1901
        %v1903 = vpop.f32.mrb[0].mxu0
        %1904 = vmatprep.mubr.bf16.mxu0 %v1750
        %1905 = vmatmul.mubr.bf16.gmra.mrb[0].mxu0 %v1623
        %v1906 = vpop.f32.mrb[0].mxu0
        %v1907 = vadd.f32 %v1648, %v1906
        %v1908 = vpop.f32.mrb[0].mxu0
        %v1909 = vpop.f32.mrb[0].mxu0
        %v1910 = vadd.f32 %v1648, %v1909
        %v1911 = vpop.f32.mrb[0].mxu0
        %1912 = vdwg.mxu0
        %v1913 = vmax.f32 %v1787, 0.0
        %v1914 = vmax.f32 %v1790, 0.0
        %v1915 = vmax.f32 %v1795, 0.0
        %v1916 = vmax.f32 %v1798, 0.0
        %v1917 = vmax.f32 %v1803, 0.0
        %v1918 = vmax.f32 %v1806, 0.0
        %v1919 = vmax.f32 %v1811, 0.0
        %v1920 = vmax.f32 %v1814, 0.0
        %v1921 = vmax.f32 %v1819, 0.0
        %v1922 = vmax.f32 %v1822, 0.0
        %v1923 = vmax.f32 %v1827, 0.0
        %v1924 = vmax.f32 %v1830, 0.0
        %v1925 = vmax.f32 %v1835, 0.0
        %v1926 = vmax.f32 %v1838, 0.0
        %v1927 = vmax.f32 %v1843, 0.0
        %v1928 = vmax.f32 %v1846, 0.0
        %v1929 = vmax.f32 %v1851, 0.0
        %v1930 = vmax.f32 %v1854, 0.0
        %v1931 = vmax.f32 %v1859, 0.0
        %v1932 = vmax.f32 %v1862, 0.0
        %v1933 = vmax.f32 %v1867, 0.0
        %v1934 = vmax.f32 %v1870, 0.0
        %v1935 = vmax.f32 %v1875, 0.0
        %v1936 = vmax.f32 %v1878, 0.0
        %v1937 = vmax.f32 %v1883, 0.0
        %v1938 = vmax.f32 %v1886, 0.0
        %v1939 = vmax.f32 %v1891, 0.0
        %v1940 = vmax.f32 %v1894, 0.0
        %v1941 = vmax.f32 %v1899, 0.0
        %v1942 = vmax.f32 %v1902, 0.0
        %v1943 = vmax.f32 %v1907, 0.0
        %v1944 = vmax.f32 %v1910, 0.0
        %v1945 = vpack.c.bf16 %v1913, %v1913
        %v1946 = vpack.c.bf16 %v1914, %v1914
        %v1947 = vpack.c.bf16 %v1915, %v1915
        %v1948 = vpack.c.bf16 %v1916, %v1916
        %v1949 = vpack.c.bf16 %v1917, %v1917
        %v1950 = vpack.c.bf16 %v1918, %v1918
        %v1951 = vpack.c.bf16 %v1919, %v1919
        %v1952 = vpack.c.bf16 %v1920, %v1920
        %v1953 = vpack.c.bf16 %v1921, %v1921
        %v1954 = vpack.c.bf16 %v1922, %v1922
        %v1955 = vpack.c.bf16 %v1923, %v1923
        %v1956 = vpack.c.bf16 %v1924, %v1924
        %v1957 = vpack.c.bf16 %v1925, %v1925
        %v1958 = vpack.c.bf16 %v1926, %v1926
        %v1959 = vpack.c.bf16 %v1927, %v1927
        %v1960 = vpack.c.bf16 %v1928, %v1928
        %v1961 = vpack.c.bf16 %v1929, %v1929
        %v1962 = vpack.c.bf16 %v1930, %v1930
        %v1963 = vpack.c.bf16 %v1931, %v1931
        %v1964 = vpack.c.bf16 %v1932, %v1932
        %v1965 = vpack.c.bf16 %v1933, %v1933
        %v1966 = vpack.c.bf16 %v1934, %v1934
        %v1967 = vpack.c.bf16 %v1935, %v1935
        %v1968 = vpack.c.bf16 %v1936, %v1936
        %v1969 = vpack.c.bf16 %v1937, %v1937
        %v1970 = vpack.c.bf16 %v1938, %v1938
        %v1971 = vpack.c.bf16 %v1939, %v1939
        %v1972 = vpack.c.bf16 %v1940, %v1940
        %v1973 = vpack.c.bf16 %v1941, %v1941
        %v1974 = vpack.c.bf16 %v1942, %v1942
        %v1975 = vpack.c.bf16 %v1943, %v1943
        %v1976 = vpack.c.bf16 %v1944, %v1944
        %vm1977 = vcmask 257024
        %1978 = vst.msk [vmem:[%s166] sm:$0xf] %vm1977, %v1945
        %1979 = vst.msk [vmem:[%s166 + $0x4] sm:$0xf] %vm1977, %v1946
        %1980 = vst.msk [vmem:[%s166 + $0x8] sm:$0xf] %vm1977, %v1947
        %1981 = vst.msk [vmem:[%s166 + $0xc] sm:$0xf] %vm1977, %v1948
        %1982 = vst.msk [vmem:[%s166 + $0x10] sm:$0xf] %vm1977, %v1949
        %1983 = vst.msk [vmem:[%s166 + $0x14] sm:$0xf] %vm1977, %v1950
        %1984 = vst.msk [vmem:[%s166 + $0x18] sm:$0xf] %vm1977, %v1951
        %1985 = vst.msk [vmem:[%s166 + $0x1c] sm:$0xf] %vm1977, %v1952
        %1986 = vst.msk [vmem:[%s166 + $0x20] sm:$0xf] %vm1977, %v1953
        %1987 = vst.msk [vmem:[%s166 + $0x24] sm:$0xf] %vm1977, %v1954
        %1988 = vst.msk [vmem:[%s166 + $0x28] sm:$0xf] %vm1977, %v1955
        %1989 = vst.msk [vmem:[%s166 + $0x2c] sm:$0xf] %vm1977, %v1956
        %1990 = vst.msk [vmem:[%s166 + $0x30] sm:$0xf] %vm1977, %v1957
        %1991 = vst.msk [vmem:[%s166 + $0x34] sm:$0xf] %vm1977, %v1958
        %1992 = vst.msk [vmem:[%s166 + $0x38] sm:$0xf] %vm1977, %v1959
        %1993 = vst.msk [vmem:[%s166 + $0x3c] sm:$0xf] %vm1977, %v1960
        %1994 = vst.msk [vmem:[%s166 + $0x40] sm:$0xf] %vm1977, %v1961
        %1995 = vst.msk [vmem:[%s166 + $0x44] sm:$0xf] %vm1977, %v1962
        %1996 = vst.msk [vmem:[%s166 + $0x48] sm:$0xf] %vm1977, %v1963
        %1997 = vst.msk [vmem:[%s166 + $0x4c] sm:$0xf] %vm1977, %v1964
        %1998 = vst.msk [vmem:[%s166 + $0x50] sm:$0xf] %vm1977, %v1965
        %1999 = vst.msk [vmem:[%s166 + $0x54] sm:$0xf] %vm1977, %v1966
        %2000 = vst.msk [vmem:[%s166 + $0x58] sm:$0xf] %vm1977, %v1967
        %2001 = vst.msk [vmem:[%s166 + $0x5c] sm:$0xf] %vm1977, %v1968
        %2002 = vst.msk [vmem:[%s166 + $0x60] sm:$0xf] %vm1977, %v1969
        %2003 = vst.msk [vmem:[%s166 + $0x64] sm:$0xf] %vm1977, %v1970
        %2004 = vst.msk [vmem:[%s166 + $0x68] sm:$0xf] %vm1977, %v1971
        %2005 = vst.msk [vmem:[%s166 + $0x6c] sm:$0xf] %vm1977, %v1972
        %2006 = vst.msk [vmem:[%s166 + $0x70] sm:$0xf] %vm1977, %v1973
        %2007 = vst.msk [vmem:[%s166 + $0x74] sm:$0xf] %vm1977, %v1974
        %2008 = vst.msk [vmem:[%s166 + $0x78] sm:$0xf] %vm1977, %v1975
        %2009 = vst.msk [vmem:[%s166 + $0x7c] sm:$0xf] %vm1977, %v1976
        %s2010 = sand.u32 %s93, 1
        %s2011 = scalar_lea.sflag [#allocation3], %s2010
        %s2012 = sand.u32 %s93, 1
        %s2013 = smul.addr %s2012, 128
        %s2014 = scalar_lea.vmem [#allocation2], %s2013
        // Predicated region
        $region33: #{tpu_custom_call.1} parent=31 // pred_check
          %p2015 = pneg %p103
        $region34: #{tpu_custom_call.1} parent=31 // pred_check_branch
          %2017 = sbr.rel (%p2015) target = $region36
        $region35: #{tpu_custom_call.1} parent=31 // pred_region
          %s2018 = smul.u32 4, %s17
          %s2020 = ssub.s32 2048, 2048
          %2021 = vsyncadd %s2011, %s2020
          %s2022 = smul.addr %s2018, 8
          %s2023 = smul.addr %s2022, 64
          %s2024 = scalar_lea.hbm %s3, %s2023
          %s2025 = sshll.u32 %s2014, 4
          %s2026 = int_to_ptr.vmem [resolvable:$true] %s2025
          %2031 = dma.vmem_to_hbm [thread:$0]  %s2026, 2048, %s2024, %s2011, 64, 64, 4
        $region36: #{tpu_custom_call.1} parent=31 // pred_fallthru
          _
      $region32: #{tpu_custom_call.1} parent=5 // pred_fallthru
        _
      %p2032 = scmp.le.s32.totalorder 2, %s12
      // Predicated region
      $region37: #{tpu_custom_call.1} parent=5 // pred_check
        %p2033 = pneg %p2032
      $region38: #{tpu_custom_call.1} parent=5 // pred_check_branch
        %2035 = sbr.rel (%p2033) target = $region40
      $region39: #{tpu_custom_call.1} parent=5 // pred_region
        %s2036 = ssub.s32 %s12, 2
        // Predicated region
        $region41: #{tpu_custom_call.1} parent=39 // pred_check
          %p2037 = pneg %p109
        $region42: #{tpu_custom_call.1} parent=39 // pred_check_branch
          %2039 = sbr.rel (%p2037) target = $region44
        $region43: #{tpu_custom_call.1} parent=39 // pred_region
          %s2040 = sand.u32 %s94, 1
          %s2041 = scalar_lea.sflag [#allocation3], %s2040
          %s2042 = sand.u32 %s94, 1
          %s2043 = smul.addr %s2042, 128
          %s2044 = scalar_lea.vmem [#allocation2], %s2043
          %2045 = dma.done %s2041, 2048
        $region44: #{tpu_custom_call.1} parent=39 // pred_fallthru
          _
      $region40: #{tpu_custom_call.1} parent=5 // pred_fallthru
        _
    $region6: #{tpu_custom_call.1} parent=1 // loop_footer
      %s16 = sadd.s32 1, %s12
    $region7: #{tpu_custom_call.1} parent=1 // loop_footer_branch
      %11 = sbr.rel target = $region3
    $region8: #{tpu_custom_call.1} parent=1 // loop_exit
      _
    %2046 = vsyncpa [#allocation3], 1
    %s2047 = scalar_lea.sflag [#allocation3], 1
    %2048 = vsyncpa %s2047, 1

</llo_original>
